<compile_context>
chip_gen: v5e
topology: v5e:2x2
jax: 0.10.0
libtpu: 0.0.40
codegen_flags: <defaults>
</compile_context>

<pallas_src>
import functools

import jax
import jax.numpy as jnp
from jax.experimental import pallas as pl
from jax.experimental.pallas import tpu as pltpu


def _make_kernel(kh, kw, stride, th, ow, c, ocp):
    """Builds the fused conv+BN+ReLU6 kernel for static geometry."""

    def kernel(x_ref, w_ref, shift_ref, o_ref):
        # x_ref:     (band_h, Wp, C)   bf16  padded NHWC input row band
        # w_ref:     (KH*KW, C, OCp)   bf16  BN-scale-folded conv weight
        # shift_ref: (1, OCp)          f32   folded BN shift
        # o_ref:     (th*OW, OCp)      f32   output rows for this tile
        xv = x_ref[...]
        acc = jnp.zeros((th * ow, ocp), jnp.float32)
        # Implicit im2col: one (th*OW, C) x (C, OCp) MXU matmul per (kh, kw)
        # tap, fully unrolled (KH*KW is small), accumulated in f32.
        for i in range(kh):
            for j in range(kw):
                xs = xv[i:i + (th - 1) * stride + 1:stride,
                        j:j + (ow - 1) * stride + 1:stride, :]   # (th, OW, C)
                xs2 = xs.reshape(th * ow, c)                     # collapse rows
                w_ij = w_ref[i * kw + j]                         # (C, OCp)
                acc = acc + jnp.dot(xs2, w_ij,
                                    preferred_element_type=jnp.float32)
        y = acc + shift_ref[...]            # (1, OCp) broadcasts over rows
        o_ref[...] = jnp.clip(y, 0.0, 6.0).astype(o_ref.dtype)  # ReLU6

    return kernel


@functools.partial(jax.jit, static_argnames=("stride", "padding"))
def conv_layer_forward(x, weight, gamma, beta, running_mean, running_var,
                       *, stride=1, padding=0, eps=1e-5):
    """Fused Conv2d(bias=False) + BatchNorm2d(eval) + ReLU6.

    x:      (N, C, H, W)       float32
    weight: (OC, C, KH, KW)    float32
    gamma/beta/running_mean/running_var: (OC,) float32
    returns (N, OC, OH, OW)    float32
    """
    n, c, h, w = x.shape
    oc, _, kh, kw = weight.shape
    s = stride

    oh = (h + 2 * padding - kh) // s + 1
    ow = (w + 2 * padding - kw) // s + 1

    # ---- output-row tiling ---------------------------------------------------
    # Target a large output slab (~1024 rows of th*OW) per grid step to amortize
    # per-step overhead, but keep >= 2 grid steps so both TCs (v7x) get work.
    target_rows = 1024
    th = max(1, min(oh, max(1, target_rows // max(ow, 1))))
    while n * ((oh + th - 1) // th) < 2 and th > 1:
        th = (th + 1) // 2
    nt = (oh + th - 1) // th
    oh_pad = nt * th
    band_h = (th - 1) * s + kh

    # ---- input: NCHW -> NHWC, zero-pad, slice into non-overlapping row bands --
    # TODO(synk): if callers can accept NHWC end-to-end, the two wrapper
    # transposes (here and on the output) could be dropped entirely.
    x_nhwc = jnp.transpose(x, (0, 2, 3, 1))
    hp_needed = (oh_pad - 1) * s + kh
    pad_bottom = max(padding, hp_needed - (h + padding))
    x_pad = jnp.pad(x_nhwc, ((0, 0), (padding, pad_bottom),
                             (padding, padding), (0, 0)))
    wp = w + 2 * padding
    bands = jnp.stack([x_pad[:, t * th * s: t * th * s + band_h]
                       for t in range(nt)], axis=1)      # (N, nt, band_h, Wp, C)
    x_bands = bands.reshape(n * nt, band_h, wp, c).astype(jnp.bfloat16)

    # ---- weights: fold BN scale, pad OC to a lane-dense multiple of 128 -------
    scale = gamma / jnp.sqrt(running_var + eps)           # (OC,)
    shift = beta - running_mean * scale                   # (OC,)
    ocp = ((oc + 127) // 128) * 128
    wt = jnp.transpose(weight, (2, 3, 1, 0)).reshape(kh * kw, c, oc)
    wt = wt * scale[None, None, :]
    wt = jnp.pad(wt, ((0, 0), (0, 0), (0, ocp - oc))).astype(jnp.bfloat16)
    shift_p = jnp.pad(shift, (0, ocp - oc)).reshape(1, ocp).astype(jnp.float32)

    kernel = _make_kernel(kh, kw, s, th, ow, c, ocp)

    out = pl.pallas_call(
        kernel,
        out_shape=jax.ShapeDtypeStruct((n * nt, th * ow, ocp), jnp.float32),
        grid_spec=pltpu.PrefetchScalarGridSpec(
            num_scalar_prefetch=0,
            grid=(n * nt,),
            in_specs=[
                pl.BlockSpec((None, band_h, wp, c), lambda i: (i, 0, 0, 0)),
                pl.BlockSpec((kh * kw, c, ocp), lambda i: (0, 0, 0)),
                pl.BlockSpec((1, ocp), lambda i: (0, 0)),
            ],
            out_specs=pl.BlockSpec((None, th * ow, ocp), lambda i: (i, 0, 0)),
        ),
        compiler_params=pltpu.CompilerParams(
            dimension_semantics=("parallel",),
            vmem_limit_bytes=32 * 1024 * 1024),
    )(x_bands, wt, shift_p)

    # (N*nt, th*OW, OCp) -> (N, OC, OH, OW); drop row/channel padding.
    out = out.reshape(n, oh_pad, ow, ocp)[:, :oh, :, :oc]
    return jnp.transpose(out, (0, 3, 1, 2))


def _reference(x, weight, gamma, beta, running_mean, running_var,
               *, stride, padding, eps=1e-5):
    y = jax.lax.conv_general_dilated(
        x, weight, window_strides=(stride, stride),
        padding=[(padding, padding), (padding, padding)],
        dimension_numbers=("NCHW", "OIHW", "NCHW"))
    scale = gamma / jnp.sqrt(running_var + eps)
    shift = beta - running_mean * scale
    y = y * scale[None, :, None, None] + shift[None, :, None, None]
    return jnp.clip(y, 0.0, 6.0)


if __name__ == "__main__":
    key = jax.random.PRNGKey(0)
    k_x, k_w, k_g, k_b, k_m, k_v = jax.random.split(key, 6)

    # ConvLayer(in_channels=4, out_channels=8, kernel_size=3, stride=1,
    #           padding=1, bias=False)
    N, C, H, W = 2, 4, 16, 16
    OC, KH, KW = 8, 3, 3
    stride, padding = 1, 1

    x = jax.random.normal(k_x, (N, C, H, W), dtype=jnp.float32)
    weight = jax.random.normal(k_w, (OC, C, KH, KW), dtype=jnp.float32) * 0.1
    gamma = jax.random.normal(k_g, (OC,), dtype=jnp.float32) * 0.1 + 1.0
    beta = jax.random.normal(k_b, (OC,), dtype=jnp.float32) * 0.1
    running_mean = jax.random.normal(k_m, (OC,), dtype=jnp.float32) * 0.1
    running_var = jnp.abs(jax.random.normal(k_v, (OC,), dtype=jnp.float32)) * 0.1 + 1.0

    out = conv_layer_forward(x, weight, gamma, beta, running_mean, running_var,
                             stride=stride, padding=padding)
    out = jax.block_until_ready(out)

    ref = _reference(x, weight, gamma, beta, running_mean, running_var,
                     stride=stride, padding=padding)
    assert out.shape == (N, OC, H, W), out.shape
    # bf16 operands with f32 accumulation -> loosened tolerance.
    assert jnp.allclose(out, ref, atol=5e-2, rtol=5e-2), float(
        jnp.max(jnp.abs(out - ref)))

    print("KERNEL_OK")
</pallas_src>

<mosaic_0001>
module attributes {stable_mosaic.version = 11 : i64} {
  func.func @kernel(%arg0: i32, %arg1: memref<1x18x18x4xbf16, #tpu.memory_space<vmem>>, %arg2: memref<9x4x128xbf16, #tpu.memory_space<vmem>>, %arg3: memref<1x128xf32, #tpu.memory_space<vmem>>, %arg4: memref<1x256x128xf32, #tpu.memory_space<vmem>>) attributes {dimension_semantics = [#tpu.dimension_semantics<parallel>], iteration_bounds = array<i64: 2>, scalar_prefetch = 0 : i64, scratch_operands = 0 : i64, tpu.core_type = #tpu.core_type<tc>, window_params = [{transform_indices = @transform_0, window_bounds = array<i64: 1, 18, 18, 4>}, {pipeline_mode = #tpu.pipeline_mode<synchronous>, transform_indices = @transform_1, window_bounds = array<i64: 9, 4, 128>}, {pipeline_mode = #tpu.pipeline_mode<synchronous>, transform_indices = @transform_2, window_bounds = array<i64: 1, 128>}, {transform_indices = @transform_3, window_bounds = array<i64: 1, 256, 128>}]} {
    %c0 = arith.constant 0 : index
    %c0_0 = arith.constant 0 : index
    %c0_1 = arith.constant 0 : index
    %c0_2 = arith.constant 0 : index
    %0 = vector.load %arg1[%c0, %c0_0, %c0_1, %c0_2] : memref<1x18x18x4xbf16, #tpu.memory_space<vmem>>, vector<1x18x18x4xbf16>
    %1 = vector.shape_cast %0 : vector<1x18x18x4xbf16> to vector<18x18x4xbf16>
    %cst = arith.constant 0.000000e+00 : f32
    %2 = vector.broadcast %cst : f32 to vector<256x128xf32>
    %3 = vector.extract_strided_slice %1 {offsets = [0, 0, 0], sizes = [16, 16, 4], strides = [1, 1, 1]} : vector<18x18x4xbf16> to vector<16x16x4xbf16>
    %4 = vector.shape_cast %3 : vector<16x16x4xbf16> to vector<256x4xbf16>
    %c0_3 = arith.constant 0 : index
    %c0_4 = arith.constant 0 : index
    %c0_5 = arith.constant 0 : index
    %5 = vector.load %arg2[%c0_3, %c0_4, %c0_5] : memref<9x4x128xbf16, #tpu.memory_space<vmem>>, vector<1x4x128xbf16>
    %6 = vector.shape_cast %5 : vector<1x4x128xbf16> to vector<4x128xbf16>
    %cst_6 = arith.constant dense<0.000000e+00> : vector<256x128xf32>
    %7 = tpu.matmul %4, %6, %cst_6 {dimension_numbers = #tpu.dot_dimension_numbers<[1], [0], [0], [1], [0, 0, 1, 1], [], []>} : vector<256x4xbf16>, vector<4x128xbf16>, vector<256x128xf32> -> vector<256x128xf32>
    %8 = arith.addf %2, %7 : vector<256x128xf32>
    %9 = vector.extract_strided_slice %1 {offsets = [0, 1, 0], sizes = [16, 16, 4], strides = [1, 1, 1]} : vector<18x18x4xbf16> to vector<16x16x4xbf16>
    %10 = vector.shape_cast %9 : vector<16x16x4xbf16> to vector<256x4xbf16>
    %c1 = arith.constant 1 : index
    %c0_7 = arith.constant 0 : index
    %c0_8 = arith.constant 0 : index
    %11 = vector.load %arg2[%c1, %c0_7, %c0_8] : memref<9x4x128xbf16, #tpu.memory_space<vmem>>, vector<1x4x128xbf16>
    %12 = vector.shape_cast %11 : vector<1x4x128xbf16> to vector<4x128xbf16>
    %cst_9 = arith.constant dense<0.000000e+00> : vector<256x128xf32>
    %13 = tpu.matmul %10, %12, %cst_9 {dimension_numbers = #tpu.dot_dimension_numbers<[1], [0], [0], [1], [0, 0, 1, 1], [], []>} : vector<256x4xbf16>, vector<4x128xbf16>, vector<256x128xf32> -> vector<256x128xf32>
    %14 = arith.addf %8, %13 : vector<256x128xf32>
    %15 = vector.extract_strided_slice %1 {offsets = [0, 2, 0], sizes = [16, 16, 4], strides = [1, 1, 1]} : vector<18x18x4xbf16> to vector<16x16x4xbf16>
    %16 = vector.shape_cast %15 : vector<16x16x4xbf16> to vector<256x4xbf16>
    %c2 = arith.constant 2 : index
    %c0_10 = arith.constant 0 : index
    %c0_11 = arith.constant 0 : index
    %17 = vector.load %arg2[%c2, %c0_10, %c0_11] : memref<9x4x128xbf16, #tpu.memory_space<vmem>>, vector<1x4x128xbf16>
    %18 = vector.shape_cast %17 : vector<1x4x128xbf16> to vector<4x128xbf16>
    %cst_12 = arith.constant dense<0.000000e+00> : vector<256x128xf32>
    %19 = tpu.matmul %16, %18, %cst_12 {dimension_numbers = #tpu.dot_dimension_numbers<[1], [0], [0], [1], [0, 0, 1, 1], [], []>} : vector<256x4xbf16>, vector<4x128xbf16>, vector<256x128xf32> -> vector<256x128xf32>
    %20 = arith.addf %14, %19 : vector<256x128xf32>
    %21 = vector.extract_strided_slice %1 {offsets = [1, 0, 0], sizes = [16, 16, 4], strides = [1, 1, 1]} : vector<18x18x4xbf16> to vector<16x16x4xbf16>
    %22 = vector.shape_cast %21 : vector<16x16x4xbf16> to vector<256x4xbf16>
    %c3 = arith.constant 3 : index
    %c0_13 = arith.constant 0 : index
    %c0_14 = arith.constant 0 : index
    %23 = vector.load %arg2[%c3, %c0_13, %c0_14] : memref<9x4x128xbf16, #tpu.memory_space<vmem>>, vector<1x4x128xbf16>
    %24 = vector.shape_cast %23 : vector<1x4x128xbf16> to vector<4x128xbf16>
    %cst_15 = arith.constant dense<0.000000e+00> : vector<256x128xf32>
    %25 = tpu.matmul %22, %24, %cst_15 {dimension_numbers = #tpu.dot_dimension_numbers<[1], [0], [0], [1], [0, 0, 1, 1], [], []>} : vector<256x4xbf16>, vector<4x128xbf16>, vector<256x128xf32> -> vector<256x128xf32>
    %26 = arith.addf %20, %25 : vector<256x128xf32>
    %27 = vector.extract_strided_slice %1 {offsets = [1, 1, 0], sizes = [16, 16, 4], strides = [1, 1, 1]} : vector<18x18x4xbf16> to vector<16x16x4xbf16>
    %28 = vector.shape_cast %27 : vector<16x16x4xbf16> to vector<256x4xbf16>
    %c4 = arith.constant 4 : index
    %c0_16 = arith.constant 0 : index
    %c0_17 = arith.constant 0 : index
    %29 = vector.load %arg2[%c4, %c0_16, %c0_17] : memref<9x4x128xbf16, #tpu.memory_space<vmem>>, vector<1x4x128xbf16>
    %30 = vector.shape_cast %29 : vector<1x4x128xbf16> to vector<4x128xbf16>
    %cst_18 = arith.constant dense<0.000000e+00> : vector<256x128xf32>
    %31 = tpu.matmul %28, %30, %cst_18 {dimension_numbers = #tpu.dot_dimension_numbers<[1], [0], [0], [1], [0, 0, 1, 1], [], []>} : vector<256x4xbf16>, vector<4x128xbf16>, vector<256x128xf32> -> vector<256x128xf32>
    %32 = arith.addf %26, %31 : vector<256x128xf32>
    %33 = vector.extract_strided_slice %1 {offsets = [1, 2, 0], sizes = [16, 16, 4], strides = [1, 1, 1]} : vector<18x18x4xbf16> to vector<16x16x4xbf16>
    %34 = vector.shape_cast %33 : vector<16x16x4xbf16> to vector<256x4xbf16>
    %c5 = arith.constant 5 : index
    %c0_19 = arith.constant 0 : index
    %c0_20 = arith.constant 0 : index
    %35 = vector.load %arg2[%c5, %c0_19, %c0_20] : memref<9x4x128xbf16, #tpu.memory_space<vmem>>, vector<1x4x128xbf16>
    %36 = vector.shape_cast %35 : vector<1x4x128xbf16> to vector<4x128xbf16>
    %cst_21 = arith.constant dense<0.000000e+00> : vector<256x128xf32>
    %37 = tpu.matmul %34, %36, %cst_21 {dimension_numbers = #tpu.dot_dimension_numbers<[1], [0], [0], [1], [0, 0, 1, 1], [], []>} : vector<256x4xbf16>, vector<4x128xbf16>, vector<256x128xf32> -> vector<256x128xf32>
    %38 = arith.addf %32, %37 : vector<256x128xf32>
    %39 = vector.extract_strided_slice %1 {offsets = [2, 0, 0], sizes = [16, 16, 4], strides = [1, 1, 1]} : vector<18x18x4xbf16> to vector<16x16x4xbf16>
    %40 = vector.shape_cast %39 : vector<16x16x4xbf16> to vector<256x4xbf16>
    %c6 = arith.constant 6 : index
    %c0_22 = arith.constant 0 : index
    %c0_23 = arith.constant 0 : index
    %41 = vector.load %arg2[%c6, %c0_22, %c0_23] : memref<9x4x128xbf16, #tpu.memory_space<vmem>>, vector<1x4x128xbf16>
    %42 = vector.shape_cast %41 : vector<1x4x128xbf16> to vector<4x128xbf16>
    %cst_24 = arith.constant dense<0.000000e+00> : vector<256x128xf32>
    %43 = tpu.matmul %40, %42, %cst_24 {dimension_numbers = #tpu.dot_dimension_numbers<[1], [0], [0], [1], [0, 0, 1, 1], [], []>} : vector<256x4xbf16>, vector<4x128xbf16>, vector<256x128xf32> -> vector<256x128xf32>
    %44 = arith.addf %38, %43 : vector<256x128xf32>
    %45 = vector.extract_strided_slice %1 {offsets = [2, 1, 0], sizes = [16, 16, 4], strides = [1, 1, 1]} : vector<18x18x4xbf16> to vector<16x16x4xbf16>
    %46 = vector.shape_cast %45 : vector<16x16x4xbf16> to vector<256x4xbf16>
    %c7 = arith.constant 7 : index
    %c0_25 = arith.constant 0 : index
    %c0_26 = arith.constant 0 : index
    %47 = vector.load %arg2[%c7, %c0_25, %c0_26] : memref<9x4x128xbf16, #tpu.memory_space<vmem>>, vector<1x4x128xbf16>
    %48 = vector.shape_cast %47 : vector<1x4x128xbf16> to vector<4x128xbf16>
    %cst_27 = arith.constant dense<0.000000e+00> : vector<256x128xf32>
    %49 = tpu.matmul %46, %48, %cst_27 {dimension_numbers = #tpu.dot_dimension_numbers<[1], [0], [0], [1], [0, 0, 1, 1], [], []>} : vector<256x4xbf16>, vector<4x128xbf16>, vector<256x128xf32> -> vector<256x128xf32>
    %50 = arith.addf %44, %49 : vector<256x128xf32>
    %51 = vector.extract_strided_slice %1 {offsets = [2, 2, 0], sizes = [16, 16, 4], strides = [1, 1, 1]} : vector<18x18x4xbf16> to vector<16x16x4xbf16>
    %52 = vector.shape_cast %51 : vector<16x16x4xbf16> to vector<256x4xbf16>
    %c8 = arith.constant 8 : index
    %c0_28 = arith.constant 0 : index
    %c0_29 = arith.constant 0 : index
    %53 = vector.load %arg2[%c8, %c0_28, %c0_29] : memref<9x4x128xbf16, #tpu.memory_space<vmem>>, vector<1x4x128xbf16>
    %54 = vector.shape_cast %53 : vector<1x4x128xbf16> to vector<4x128xbf16>
    %cst_30 = arith.constant dense<0.000000e+00> : vector<256x128xf32>
    %55 = tpu.matmul %52, %54, %cst_30 {dimension_numbers = #tpu.dot_dimension_numbers<[1], [0], [0], [1], [0, 0, 1, 1], [], []>} : vector<256x4xbf16>, vector<4x128xbf16>, vector<256x128xf32> -> vector<256x128xf32>
    %56 = arith.addf %50, %55 : vector<256x128xf32>
    %c0_31 = arith.constant 0 : index
    %c0_32 = arith.constant 0 : index
    %57 = vector.load %arg3[%c0_31, %c0_32] : memref<1x128xf32, #tpu.memory_space<vmem>>, vector<1x128xf32>
    %58 = vector.broadcast %57 : vector<1x128xf32> to vector<256x128xf32>
    %59 = arith.addf %56, %58 : vector<256x128xf32>
    %cst_33 = arith.constant 0.000000e+00 : f32
    %cst_34 = arith.constant 6.000000e+00 : f32
    %60 = vector.broadcast %cst_33 : f32 to vector<256x128xf32>
    %61 = arith.maximumf %60, %59 : vector<256x128xf32>
    %62 = vector.broadcast %cst_34 : f32 to vector<256x128xf32>
    %63 = arith.minimumf %62, %61 : vector<256x128xf32>
    %c0_35 = arith.constant 0 : index
    %c0_36 = arith.constant 0 : index
    %c0_37 = arith.constant 0 : index
    %64 = vector.load %arg4[%c0_35, %c0_36, %c0_37] : memref<1x256x128xf32, #tpu.memory_space<vmem>>, vector<1x256x128xf32>
    %65 = vector.shape_cast %64 : vector<1x256x128xf32> to vector<256x128xf32>
    %66 = vector.shape_cast %63 : vector<256x128xf32> to vector<1x256x128xf32>
    tpu.vector_store %arg4[%c0_35, %c0_36, %c0_37], %66 {strides = array<i32>} : memref<1x256x128xf32, #tpu.memory_space<vmem>>, vector<1x256x128xf32>,
    return
  }
  func.func @transform_0(%arg0: i32) -> (i32, i32, i32, i32) {
    %c0_i32 = arith.constant 0 : i32
    %c0_i32_0 = arith.constant 0 : i32
    %c0_i32_1 = arith.constant 0 : i32
    %c0_i32_2 = arith.constant 0 : i32
    return %arg0, %c0_i32, %c0_i32_0, %c0_i32_1 : i32, i32, i32, i32
  }
  func.func @transform_1(%arg0: i32) -> (i32, i32, i32) {
    %c0_i32 = arith.constant 0 : i32
    %c0_i32_0 = arith.constant 0 : i32
    %c0_i32_1 = arith.constant 0 : i32
    %c0_i32_2 = arith.constant 0 : i32
    return %c0_i32, %c0_i32_0, %c0_i32_1 : i32, i32, i32
  }
  func.func @transform_2(%arg0: i32) -> (i32, i32) {
    %c0_i32 = arith.constant 0 : i32
    %c0_i32_0 = arith.constant 0 : i32
    %c0_i32_1 = arith.constant 0 : i32
    return %c0_i32, %c0_i32_0 : i32, i32
  }
  func.func @transform_3(%arg0: i32) -> (i32, i32, i32) {
    %c0_i32 = arith.constant 0 : i32
    %c0_i32_0 = arith.constant 0 : i32
    %c0_i32_1 = arith.constant 0 : i32
    return %arg0, %c0_i32, %c0_i32_0 : i32, i32, i32
  }
}

</mosaic_0001>

<llo_original>
// kernel: conv_layer_forward.1
$region0: #{conv_layer_forward.1}
  #allocation0 [shape = 'u32[]', space=smem, size = 0x4, offset = 0x4, fixed_abs, tag = 'smem constant byte address 0x4 - core index']
  #allocation1 [shape = 'u32[72,128]{1,0:T(1,128)}', space=vmem, size = 0x9000, scoped, tag = 'internal scratch']
  %s0 = inlined_call_operand.vmem [shape: bf16[2,18,18,4], index: 0, kind: input, shape index: {}]
  %s1 = inlined_call_operand.vmem [shape: bf16[9,4,128], index: 1, kind: input, shape index: {}]
  %s2 = inlined_call_operand.vmem [shape: f32[1,128], index: 2, kind: input, shape index: {}]
  %s3 = inlined_call_operand.vmem [shape: f32[2,256,128], index: 3, kind: output, shape index: {}]
  %s4 = sld [smem:[#allocation0]]
  $region45: #{conv_layer_forward.1} parent=0
    _
  %s6 = ssub.s32 1, %s4
  %s7 = scalar_select 0, %s6, %s4
  loop: start=0, step=1, limit=4
  $region2: #{conv_layer_forward.1} parent=0 // loop_pre_header
    _
  $region3: #{conv_layer_forward.1} parent=0 // loop_header
    %s9 = sphi 0, %s13
    %p10 = scmp.ge.s32.totalorder %s9, 4
    %s19 = sphi 0, %s21
    %s22 = sphi 0, %s19
    %s23 = sphi 0, %s22
    %s39 = sphi 0, %s23
    %s43 = sphi 0, %s43
    %s45 = sphi 0, %s43
    %s46 = sphi 0, %s45
    %s60 = sphi 0, %s46
    %s64 = sphi 0, %s64
    %s66 = sphi 0, %s64
    %s67 = sphi 0, %s66
    %s81 = sphi 0, %s67
    %s87 = sphi 0, %s89
    %s90 = sphi 0, %s87
    %s91 = sphi 0, %s90
    %s107 = sphi 0, %s91
  $region4: #{conv_layer_forward.1} parent=0 // loop_header_branch
    %12 = sbr.rel (%p10) target = $region8
  $region5: #{conv_layer_forward.1} parent=0 // loop_body
    %s14 = ssub.s32 %s9, 1
    %s15 = ssub.s32 %s9, 2
    %s16 = sadd.s32 %s9, 1
    %s17 = ssub.s32 %s9, %s16
    %p18 = scmp.eq.s32.totalorder %s17, 0
    %s20 = sadd.s32 %s19, 1
    %s21 = scalar_select %p18, %s19, %s20
    %p24 = pneg %p18
    %p25 = scmp.eq.s32.totalorder %s9, 1
    %p26 = por %p24, %p25
    %p27 = scmp.ne.s32.totalorder %s19, %s22
    %p28 = scmp.eq.s32.totalorder %s9, 0
    %p29 = por %p27, %p28
    %p30 = scmp.ne.s32.totalorder %s19, %s22
    %p31 = scmp.eq.s32.totalorder %s14, 1
    %p32 = por %p30, %p31
    %p33 = scmp.ne.s32.totalorder %s22, %s23
    %p34 = scmp.eq.s32.totalorder %s14, 0
    %p35 = por %p33, %p34
    %p36 = scmp.ne.s32.totalorder %s22, %s23
    %p37 = scmp.eq.s32.totalorder %s15, 1
    %p38 = por %p36, %p37
    %p40 = scmp.ne.s32.totalorder %s23, %s39
    %p41 = scmp.eq.s32.totalorder %s15, 0
    %p42 = por %p40, %p41
    %s44 = sadd.s32 %s43, 1
    %p47 = scmp.eq.s32.totalorder %s9, 1
    %p48 = scmp.ne.s32.totalorder %s43, %s45
    %p49 = scmp.eq.s32.totalorder %s9, 0
    %p50 = por %p48, %p49
    %p51 = scmp.ne.s32.totalorder %s43, %s45
    %p52 = scmp.eq.s32.totalorder %s14, 1
    %p53 = por %p51, %p52
    %p54 = scmp.ne.s32.totalorder %s45, %s46
    %p55 = scmp.eq.s32.totalorder %s14, 0
    %p56 = por %p54, %p55
    %p57 = scmp.ne.s32.totalorder %s45, %s46
    %p58 = scmp.eq.s32.totalorder %s15, 1
    %p59 = por %p57, %p58
    %p61 = scmp.ne.s32.totalorder %s46, %s60
    %p62 = scmp.eq.s32.totalorder %s15, 0
    %p63 = por %p61, %p62
    %s65 = sadd.s32 %s64, 1
    %p68 = scmp.eq.s32.totalorder %s9, 1
    %p69 = scmp.ne.s32.totalorder %s64, %s66
    %p70 = scmp.eq.s32.totalorder %s9, 0
    %p71 = por %p69, %p70
    %p72 = scmp.ne.s32.totalorder %s64, %s66
    %p73 = scmp.eq.s32.totalorder %s14, 1
    %p74 = por %p72, %p73
    %p75 = scmp.ne.s32.totalorder %s66, %s67
    %p76 = scmp.eq.s32.totalorder %s14, 0
    %p77 = por %p75, %p76
    %p78 = scmp.ne.s32.totalorder %s66, %s67
    %p79 = scmp.eq.s32.totalorder %s15, 1
    %p80 = por %p78, %p79
    %p82 = scmp.ne.s32.totalorder %s67, %s81
    %p83 = scmp.eq.s32.totalorder %s15, 0
    %p84 = por %p82, %p83
    %s85 = ssub.s32 %s9, %s16
    %p86 = scmp.eq.s32.totalorder %s85, 0
    %s88 = sadd.s32 %s87, 1
    %s89 = scalar_select %p86, %s87, %s88
    %p92 = pneg %p86
    %p93 = scmp.eq.s32.totalorder %s9, 1
    %p94 = por %p92, %p93
    %p95 = scmp.ne.s32.totalorder %s87, %s90
    %p96 = scmp.eq.s32.totalorder %s9, 0
    %p97 = por %p95, %p96
    %p98 = scmp.ne.s32.totalorder %s87, %s90
    %p99 = scmp.eq.s32.totalorder %s14, 1
    %p100 = por %p98, %p99
    %p101 = scmp.ne.s32.totalorder %s90, %s91
    %p102 = scmp.eq.s32.totalorder %s14, 0
    %p103 = por %p101, %p102
    %p104 = scmp.ne.s32.totalorder %s90, %s91
    %p105 = scmp.eq.s32.totalorder %s15, 1
    %p106 = por %p104, %p105
    %p108 = scmp.ne.s32.totalorder %s91, %s107
    %p109 = scmp.eq.s32.totalorder %s15, 0
    %p110 = por %p108, %p109
    %p111 = scmp.le.s32.totalorder 1, %s9
    %p112 = scmp.lt.s32.totalorder %s9, 3
    %p113 = pnand %p111, %p112
    %p114 = pneg %p113
    // Predicated region
    $region9: #{conv_layer_forward.1} parent=5 // pred_check
      _
    $region10: #{conv_layer_forward.1} parent=5 // pred_check_branch
      %116 = sbr.rel (%p113) target = $region12
    $region11: #{conv_layer_forward.1} parent=5 // pred_region
      %s117 = ssub.s32 %s9, 1
      // Predicated region
      $region13: #{conv_layer_forward.1} parent=11 // pred_check
        %p118 = pneg %p56
      $region14: #{conv_layer_forward.1} parent=11 // pred_check_branch
        %120 = sbr.rel (%p118) target = $region16
      $region15: #{conv_layer_forward.1} parent=11 // pred_region
        _
      $region16: #{conv_layer_forward.1} parent=11 // pred_fallthru
        _
      // Predicated region
      $region17: #{conv_layer_forward.1} parent=11 // pred_check
        %p121 = pneg %p77
      $region18: #{conv_layer_forward.1} parent=11 // pred_check_branch
        %123 = sbr.rel (%p121) target = $region20
      $region19: #{conv_layer_forward.1} parent=11 // pred_region
        _
      $region20: #{conv_layer_forward.1} parent=11 // pred_fallthru
        _
    $region12: #{conv_layer_forward.1} parent=5 // pred_fallthru
      _
    %p124 = scmp.lt.s32.totalorder %s9, 2
    // Predicated region
    $region21: #{conv_layer_forward.1} parent=5 // pred_check
      %p125 = pneg %p124
    $region22: #{conv_layer_forward.1} parent=5 // pred_check_branch
      %127 = sbr.rel (%p125) target = $region24
    $region23: #{conv_layer_forward.1} parent=5 // pred_region
      // Predicated region
      $region25: #{conv_layer_forward.1} parent=23 // pred_check
        %p128 = pneg %p29
      $region26: #{conv_layer_forward.1} parent=23 // pred_check_branch
        %130 = sbr.rel (%p128) target = $region28
      $region27: #{conv_layer_forward.1} parent=23 // pred_region
        %p131 = scmp.lt.s32.totalorder %s9, 1
        %s132 = scalar_select %p131, %s9, 1
        %s133 = smul.addr %s132, 54
        %s134 = smul.addr %s133, 4
        %s135 = scalar_lea.vmem %s0, %s134
      $region28: #{conv_layer_forward.1} parent=23 // pred_fallthru
        _
    $region24: #{conv_layer_forward.1} parent=5 // pred_fallthru
      _
    %p136 = scmp.le.s32.totalorder 1, %s9
    %p137 = scmp.lt.s32.totalorder %s9, 3
    %p138 = pnand %p136, %p137
    %p139 = pneg %p138
    // Predicated region
    $region29: #{conv_layer_forward.1} parent=5 // pred_check
      _
    $region30: #{conv_layer_forward.1} parent=5 // pred_check_branch
      %141 = sbr.rel (%p138) target = $region32
    $region31: #{conv_layer_forward.1} parent=5 // pred_region
      %s142 = ssub.s32 %s9, 1
      %p143 = scmp.lt.s32.totalorder %s14, 1
      %s144 = scalar_select %p143, %s14, 1
      %s145 = smul.addr %s144, 54
      %s146 = smul.addr %s145, 4
      %s147 = scalar_lea.vmem %s0, %s146
      %p148 = pneg %p35
      %p149 = pneg %p32
      %p150 = pneg %p56
      %p151 = pneg %p53
      %p152 = pneg %p77
      %p153 = pneg %p74
      %p154 = pneg %p103
      %p155 = pneg %p100
      %p156 = scmp.lt.s32.totalorder %s14, 1
      %s157 = scalar_select %p156, %s14, 1
      %s158 = smul.addr %s157, 32
      %s159 = smul.addr %s158, 8
      %s160 = scalar_lea.vmem %s3, %s159
      %p161 = scmp.lt.s32.totalorder %s14, 1
      %s162 = scalar_select %p161, %s14, 1
      %s163 = smul.addr %s162, 54
      %s164 = smul.addr %s163, 4
      %s165 = scalar_lea.vmem %s0, %s164
      %p166 = scmp.lt.s32.totalorder %s14, 1
      %s167 = scalar_select %p166, %s14, 1
      %s168 = smul.addr %s167, 32
      %s169 = smul.addr %s168, 8
      %s170 = scalar_lea.vmem %s3, %s169
      %v172 = vld [vmem:[%s165] sm:$0xf]
      %v173 = vld [vmem:[%s165 + $0x4] sm:$0xf]
      %v174 = vld [vmem:[%s165 + $0x8] sm:$0x1]
      %v175 = vld [vmem:[%s165 + $0xc] sm:$0xf]
      %v176 = vld [vmem:[%s165 + $0x10] sm:$0xf]
      %v177 = vld [vmem:[%s165 + $0x14] sm:$0x1]
      %v178 = vld [vmem:[%s165 + $0x18] sm:$0xf]
      %v179 = vld [vmem:[%s165 + $0x1c] sm:$0xf]
      %v180 = vld [vmem:[%s165 + $0x20] sm:$0x1]
      %v181 = vld [vmem:[%s165 + $0x24] sm:$0xf]
      %v182 = vld [vmem:[%s165 + $0x28] sm:$0xf]
      %v183 = vld [vmem:[%s165 + $0x2c] sm:$0x1]
      %v184 = vld [vmem:[%s165 + $0x30] sm:$0xf]
      %v185 = vld [vmem:[%s165 + $0x34] sm:$0xf]
      %v186 = vld [vmem:[%s165 + $0x38] sm:$0x1]
      %v187 = vld [vmem:[%s165 + $0x3c] sm:$0xf]
      %v188 = vld [vmem:[%s165 + $0x40] sm:$0xf]
      %v189 = vld [vmem:[%s165 + $0x44] sm:$0x1]
      %v190 = vld [vmem:[%s165 + $0x48] sm:$0xf]
      %v191 = vld [vmem:[%s165 + $0x4c] sm:$0xf]
      %v192 = vld [vmem:[%s165 + $0x50] sm:$0x1]
      %v193 = vld [vmem:[%s165 + $0x54] sm:$0xf]
      %v194 = vld [vmem:[%s165 + $0x58] sm:$0xf]
      %v195 = vld [vmem:[%s165 + $0x5c] sm:$0x1]
      %v196 = vld [vmem:[%s165 + $0x60] sm:$0xf]
      %v197 = vld [vmem:[%s165 + $0x64] sm:$0xf]
      %v198 = vld [vmem:[%s165 + $0x68] sm:$0x1]
      %v199 = vld [vmem:[%s165 + $0x6c] sm:$0xf]
      %v200 = vld [vmem:[%s165 + $0x70] sm:$0xf]
      %v201 = vld [vmem:[%s165 + $0x74] sm:$0x1]
      %v202 = vld [vmem:[%s165 + $0x78] sm:$0xf]
      %v203 = vld [vmem:[%s165 + $0x7c] sm:$0xf]
      %v204 = vld [vmem:[%s165 + $0x80] sm:$0x1]
      %v205 = vld [vmem:[%s165 + $0x84] sm:$0xf]
      %v206 = vld [vmem:[%s165 + $0x88] sm:$0xf]
      %v207 = vld [vmem:[%s165 + $0x8c] sm:$0x1]
      %v208 = vld [vmem:[%s165 + $0x90] sm:$0xf]
      %v209 = vld [vmem:[%s165 + $0x94] sm:$0xf]
      %v210 = vld [vmem:[%s165 + $0x98] sm:$0x1]
      %v211 = vld [vmem:[%s165 + $0x9c] sm:$0xf]
      %v212 = vld [vmem:[%s165 + $0xa0] sm:$0xf]
      %v213 = vld [vmem:[%s165 + $0xa4] sm:$0x1]
      %v214 = vld [vmem:[%s165 + $0xa8] sm:$0xf]
      %v215 = vld [vmem:[%s165 + $0xac] sm:$0xf]
      %v216 = vld [vmem:[%s165 + $0xb0] sm:$0x1]
      %v217 = vld [vmem:[%s165 + $0xb4] sm:$0xf]
      %v218 = vld [vmem:[%s165 + $0xb8] sm:$0xf]
      %v219 = vld [vmem:[%s165 + $0xbc] sm:$0x1]
      %v220 = vld [vmem:[%s165 + $0xc0] sm:$0xf]
      %v221 = vld [vmem:[%s165 + $0xc4] sm:$0xf]
      %v222 = vld [vmem:[%s165 + $0xc8] sm:$0x1]
      %v223 = vld [vmem:[%s165 + $0xcc] sm:$0xf]
      %v224 = vld [vmem:[%s165 + $0xd0] sm:$0xf]
      %v225 = vld [vmem:[%s165 + $0xd4] sm:$0x1]
      %v226 = vld [vmem:[%s1] sm:$0x3]
      %vm227 = vsmask.f32 3328
      %vm228 = vsmask.f32 7440
      %vm229 = vmor %vm227, %vm228
      %v231 = vshrl.u32 %v172, 16
      %v233 = vrot.slane %v231, 4
      %v234 = vshll.u32 %v172, 16
      %v236 = vrot.slane %v234, 5
      %v237 = vor.u32 %v233, %v236
      %v238 = vrot.slane %v237, 4
      %v240 = vshll.u32 %v173, 16
      %v242 = vrot.slane %v240, 5
      %v243 = vsel %vm229, %v238, %v242
      %v244 = vshrl.u32 %v173, 16
      %v246 = vrot.slane %v244, 4
      %v247 = vor.u32 %v246, %v242
      %v248 = vrot.slane %v247, 4
      %v250 = vshll.u32 %v174, 16
      %v252 = vrot.slane %v250, 5
      %v253 = vsel %vm229, %v248, %v252
      %v255 = vshrl.u32 %v175, 16
      %v257 = vrot.slane %v255, 4
      %v258 = vshll.u32 %v175, 16
      %v260 = vrot.slane %v258, 5
      %v261 = vor.u32 %v257, %v260
      %v262 = vrot.slane %v261, 4
      %v264 = vshll.u32 %v176, 16
      %v266 = vrot.slane %v264, 5
      %v267 = vsel %vm229, %v262, %v266
      %v268 = vshrl.u32 %v176, 16
      %v270 = vrot.slane %v268, 4
      %v271 = vor.u32 %v270, %v266
      %v272 = vrot.slane %v271, 4
      %v274 = vshll.u32 %v177, 16
      %v276 = vrot.slane %v274, 5
      %v277 = vsel %vm229, %v272, %v276
      %v279 = vshrl.u32 %v178, 16
      %v281 = vrot.slane %v279, 4
      %v282 = vshll.u32 %v178, 16
      %v284 = vrot.slane %v282, 5
      %v285 = vor.u32 %v281, %v284
      %v286 = vrot.slane %v285, 4
      %v288 = vshll.u32 %v179, 16
      %v290 = vrot.slane %v288, 5
      %v291 = vsel %vm229, %v286, %v290
      %v292 = vshrl.u32 %v179, 16
      %v294 = vrot.slane %v292, 4
      %v295 = vor.u32 %v294, %v290
      %v296 = vrot.slane %v295, 4
      %v298 = vshll.u32 %v180, 16
      %v300 = vrot.slane %v298, 5
      %v301 = vsel %vm229, %v296, %v300
      %v303 = vshrl.u32 %v181, 16
      %v305 = vrot.slane %v303, 4
      %v306 = vshll.u32 %v181, 16
      %v308 = vrot.slane %v306, 5
      %v309 = vor.u32 %v305, %v308
      %v310 = vrot.slane %v309, 4
      %v312 = vshll.u32 %v182, 16
      %v314 = vrot.slane %v312, 5
      %v315 = vsel %vm229, %v310, %v314
      %v316 = vshrl.u32 %v182, 16
      %v318 = vrot.slane %v316, 4
      %v319 = vor.u32 %v318, %v314
      %v320 = vrot.slane %v319, 4
      %v322 = vshll.u32 %v183, 16
      %v324 = vrot.slane %v322, 5
      %v325 = vsel %vm229, %v320, %v324
      %v327 = vshrl.u32 %v184, 16
      %v329 = vrot.slane %v327, 4
      %v330 = vshll.u32 %v184, 16
      %v332 = vrot.slane %v330, 5
      %v333 = vor.u32 %v329, %v332
      %v334 = vrot.slane %v333, 4
      %v336 = vshll.u32 %v185, 16
      %v338 = vrot.slane %v336, 5
      %v339 = vsel %vm229, %v334, %v338
      %v340 = vshrl.u32 %v185, 16
      %v342 = vrot.slane %v340, 4
      %v343 = vor.u32 %v342, %v338
      %v344 = vrot.slane %v343, 4
      %v346 = vshll.u32 %v186, 16
      %v348 = vrot.slane %v346, 5
      %v349 = vsel %vm229, %v344, %v348
      %v351 = vshrl.u32 %v187, 16
      %v353 = vrot.slane %v351, 4
      %v354 = vshll.u32 %v187, 16
      %v356 = vrot.slane %v354, 5
      %v357 = vor.u32 %v353, %v356
      %v358 = vrot.slane %v357, 4
      %v360 = vshll.u32 %v188, 16
      %v362 = vrot.slane %v360, 5
      %v363 = vsel %vm229, %v358, %v362
      %v364 = vshrl.u32 %v188, 16
      %v366 = vrot.slane %v364, 4
      %v367 = vor.u32 %v366, %v362
      %v368 = vrot.slane %v367, 4
      %v370 = vshll.u32 %v189, 16
      %v372 = vrot.slane %v370, 5
      %v373 = vsel %vm229, %v368, %v372
      %v375 = vshrl.u32 %v190, 16
      %v377 = vrot.slane %v375, 4
      %v378 = vshll.u32 %v190, 16
      %v380 = vrot.slane %v378, 5
      %v381 = vor.u32 %v377, %v380
      %v382 = vrot.slane %v381, 4
      %v384 = vshll.u32 %v191, 16
      %v386 = vrot.slane %v384, 5
      %v387 = vsel %vm229, %v382, %v386
      %v388 = vshrl.u32 %v191, 16
      %v390 = vrot.slane %v388, 4
      %v391 = vor.u32 %v390, %v386
      %v392 = vrot.slane %v391, 4
      %v394 = vshll.u32 %v192, 16
      %v396 = vrot.slane %v394, 5
      %v397 = vsel %vm229, %v392, %v396
      %v399 = vshrl.u32 %v193, 16
      %v401 = vrot.slane %v399, 4
      %v402 = vshll.u32 %v193, 16
      %v404 = vrot.slane %v402, 5
      %v405 = vor.u32 %v401, %v404
      %v406 = vrot.slane %v405, 4
      %v408 = vshll.u32 %v194, 16
      %v410 = vrot.slane %v408, 5
      %v411 = vsel %vm229, %v406, %v410
      %v412 = vshrl.u32 %v194, 16
      %v414 = vrot.slane %v412, 4
      %v415 = vor.u32 %v414, %v410
      %v416 = vrot.slane %v415, 4
      %v418 = vshll.u32 %v195, 16
      %v420 = vrot.slane %v418, 5
      %v421 = vsel %vm229, %v416, %v420
      %v423 = vshrl.u32 %v196, 16
      %v425 = vrot.slane %v423, 4
      %v426 = vshll.u32 %v196, 16
      %v428 = vrot.slane %v426, 5
      %v429 = vor.u32 %v425, %v428
      %v430 = vrot.slane %v429, 4
      %v432 = vshll.u32 %v197, 16
      %v434 = vrot.slane %v432, 5
      %v435 = vsel %vm229, %v430, %v434
      %v436 = vshrl.u32 %v197, 16
      %v438 = vrot.slane %v436, 4
      %v439 = vor.u32 %v438, %v434
      %v440 = vrot.slane %v439, 4
      %v442 = vshll.u32 %v198, 16
      %v444 = vrot.slane %v442, 5
      %v445 = vsel %vm229, %v440, %v444
      %v447 = vshrl.u32 %v199, 16
      %v449 = vrot.slane %v447, 4
      %v450 = vshll.u32 %v199, 16
      %v452 = vrot.slane %v450, 5
      %v453 = vor.u32 %v449, %v452
      %v454 = vrot.slane %v453, 4
      %v456 = vshll.u32 %v200, 16
      %v458 = vrot.slane %v456, 5
      %v459 = vsel %vm229, %v454, %v458
      %v460 = vshrl.u32 %v200, 16
      %v462 = vrot.slane %v460, 4
      %v463 = vor.u32 %v462, %v458
      %v464 = vrot.slane %v463, 4
      %v466 = vshll.u32 %v201, 16
      %v468 = vrot.slane %v466, 5
      %v469 = vsel %vm229, %v464, %v468
      %v471 = vshrl.u32 %v202, 16
      %v473 = vrot.slane %v471, 4
      %v474 = vshll.u32 %v202, 16
      %v476 = vrot.slane %v474, 5
      %v477 = vor.u32 %v473, %v476
      %v478 = vrot.slane %v477, 4
      %v480 = vshll.u32 %v203, 16
      %v482 = vrot.slane %v480, 5
      %v483 = vsel %vm229, %v478, %v482
      %v484 = vshrl.u32 %v203, 16
      %v486 = vrot.slane %v484, 4
      %v487 = vor.u32 %v486, %v482
      %v488 = vrot.slane %v487, 4
      %v490 = vshll.u32 %v204, 16
      %v492 = vrot.slane %v490, 5
      %v493 = vsel %vm229, %v488, %v492
      %v495 = vshrl.u32 %v205, 16
      %v497 = vrot.slane %v495, 4
      %v498 = vshll.u32 %v205, 16
      %v500 = vrot.slane %v498, 5
      %v501 = vor.u32 %v497, %v500
      %v502 = vrot.slane %v501, 4
      %v504 = vshll.u32 %v206, 16
      %v506 = vrot.slane %v504, 5
      %v507 = vsel %vm229, %v502, %v506
      %v508 = vshrl.u32 %v206, 16
      %v510 = vrot.slane %v508, 4
      %v511 = vor.u32 %v510, %v506
      %v512 = vrot.slane %v511, 4
      %v514 = vshll.u32 %v207, 16
      %v516 = vrot.slane %v514, 5
      %v517 = vsel %vm229, %v512, %v516
      %v519 = vshrl.u32 %v208, 16
      %v521 = vrot.slane %v519, 4
      %v522 = vshll.u32 %v208, 16
      %v524 = vrot.slane %v522, 5
      %v525 = vor.u32 %v521, %v524
      %v526 = vrot.slane %v525, 4
      %v528 = vshll.u32 %v209, 16
      %v530 = vrot.slane %v528, 5
      %v531 = vsel %vm229, %v526, %v530
      %v532 = vshrl.u32 %v209, 16
      %v534 = vrot.slane %v532, 4
      %v535 = vor.u32 %v534, %v530
      %v536 = vrot.slane %v535, 4
      %v538 = vshll.u32 %v210, 16
      %v540 = vrot.slane %v538, 5
      %v541 = vsel %vm229, %v536, %v540
      %v543 = vshrl.u32 %v211, 16
      %v545 = vrot.slane %v543, 4
      %v546 = vshll.u32 %v211, 16
      %v548 = vrot.slane %v546, 5
      %v549 = vor.u32 %v545, %v548
      %v550 = vrot.slane %v549, 4
      %v552 = vshll.u32 %v212, 16
      %v554 = vrot.slane %v552, 5
      %v555 = vsel %vm229, %v550, %v554
      %v556 = vshrl.u32 %v212, 16
      %v558 = vrot.slane %v556, 4
      %v559 = vor.u32 %v558, %v554
      %v560 = vrot.slane %v559, 4
      %v562 = vshll.u32 %v213, 16
      %v564 = vrot.slane %v562, 5
      %v565 = vsel %vm229, %v560, %v564
      %v567 = vshrl.u32 %v214, 16
      %v569 = vrot.slane %v567, 4
      %v570 = vshll.u32 %v214, 16
      %v572 = vrot.slane %v570, 5
      %v573 = vor.u32 %v569, %v572
      %v574 = vrot.slane %v573, 4
      %v576 = vshll.u32 %v215, 16
      %v578 = vrot.slane %v576, 5
      %v579 = vsel %vm229, %v574, %v578
      %v580 = vshrl.u32 %v215, 16
      %v582 = vrot.slane %v580, 4
      %v583 = vor.u32 %v582, %v578
      %v584 = vrot.slane %v583, 4
      %v586 = vshll.u32 %v216, 16
      %v588 = vrot.slane %v586, 5
      %v589 = vsel %vm229, %v584, %v588
      %v591 = vshrl.u32 %v217, 16
      %v593 = vrot.slane %v591, 4
      %v594 = vshll.u32 %v217, 16
      %v596 = vrot.slane %v594, 5
      %v597 = vor.u32 %v593, %v596
      %v598 = vrot.slane %v597, 4
      %v600 = vshll.u32 %v218, 16
      %v602 = vrot.slane %v600, 5
      %v603 = vsel %vm229, %v598, %v602
      %v604 = vshrl.u32 %v218, 16
      %v606 = vrot.slane %v604, 4
      %v607 = vor.u32 %v606, %v602
      %v608 = vrot.slane %v607, 4
      %v610 = vshll.u32 %v219, 16
      %v612 = vrot.slane %v610, 5
      %v613 = vsel %vm229, %v608, %v612
      %s614 = scalar_lea.vmem %s1, 2
      %v615 = vld [vmem:[%s614] sm:$0x3]
      %v616 = vunpack.c.l.b16 %v243
      %v617 = vunpack.c.l.b16 %v253
      %v618 = vunpack.c.l.b16 %v267
      %v619 = vunpack.c.l.b16 %v277
      %v620 = vunpack.c.l.b16 %v291
      %v621 = vunpack.c.l.b16 %v301
      %v622 = vunpack.c.l.b16 %v315
      %v623 = vunpack.c.l.b16 %v325
      %v624 = vunpack.c.l.b16 %v339
      %v625 = vunpack.c.l.b16 %v349
      %v626 = vunpack.c.l.b16 %v363
      %v627 = vunpack.c.l.b16 %v373
      %v628 = vunpack.c.l.b16 %v387
      %v629 = vunpack.c.l.b16 %v397
      %v630 = vunpack.c.l.b16 %v411
      %v631 = vunpack.c.l.b16 %v421
      %v632 = vunpack.c.l.b16 %v435
      %v633 = vunpack.c.l.b16 %v445
      %v634 = vunpack.c.l.b16 %v459
      %v635 = vunpack.c.l.b16 %v469
      %v636 = vunpack.c.l.b16 %v483
      %v637 = vunpack.c.l.b16 %v493
      %v638 = vunpack.c.l.b16 %v507
      %v639 = vunpack.c.l.b16 %v517
      %v640 = vunpack.c.l.b16 %v531
      %v641 = vunpack.c.l.b16 %v541
      %v642 = vunpack.c.l.b16 %v555
      %v643 = vunpack.c.l.b16 %v565
      %v644 = vunpack.c.l.b16 %v579
      %v645 = vunpack.c.l.b16 %v589
      %v646 = vunpack.c.l.b16 %v603
      %v647 = vunpack.c.l.b16 %v613
      %v648 = vpack.c.b16 %v617, %v616
      %v649 = vpack.c.b16 %v619, %v618
      %v650 = vpack.c.b16 %v621, %v620
      %v651 = vpack.c.b16 %v623, %v622
      %v652 = vpack.c.b16 %v625, %v624
      %v653 = vpack.c.b16 %v627, %v626
      %v654 = vpack.c.b16 %v629, %v628
      %v655 = vpack.c.b16 %v631, %v630
      %v656 = vpack.c.b16 %v633, %v632
      %v657 = vpack.c.b16 %v635, %v634
      %v658 = vpack.c.b16 %v637, %v636
      %v659 = vpack.c.b16 %v639, %v638
      %v660 = vpack.c.b16 %v641, %v640
      %v661 = vpack.c.b16 %v643, %v642
      %v662 = vpack.c.b16 %v645, %v644
      %v663 = vpack.c.b16 %v647, %v646
      %vm664 = vcmask 31744
      %v666 = vsel %vm664, %v648, 0
      %v669 = vsel %vm664, %v649, 0
      %v672 = vsel %vm664, %v650, 0
      %v675 = vsel %vm664, %v651, 0
      %v678 = vsel %vm664, %v652, 0
      %v681 = vsel %vm664, %v653, 0
      %v684 = vsel %vm664, %v654, 0
      %v687 = vsel %vm664, %v655, 0
      %v690 = vsel %vm664, %v656, 0
      %v693 = vsel %vm664, %v657, 0
      %v696 = vsel %vm664, %v658, 0
      %v699 = vsel %vm664, %v659, 0
      %v702 = vsel %vm664, %v660, 0
      %v705 = vsel %vm664, %v661, 0
      %v708 = vsel %vm664, %v662, 0
      %v711 = vsel %vm664, %v663, 0
      %vm713 = vcmask 1041408
      %v715 = vsel %vm713, %v615, 0
      %717 = vmatpush.bf16.msra.mxu0 0
      %718 = vmatpush.bf16.msra.mxu0 0
      %719 = vmatpush.bf16.msra.mxu0 0
      %720 = vmatpush.bf16.msra.mxu0 0
      %721 = vmatpush.bf16.msra.mxu0 0
      %722 = vmatpush.bf16.msra.mxu0 0
      %723 = vmatpush.bf16.msra.mxu0 0
      %724 = vmatpush.bf16.msra.mxu0 %v715
      %725 = vmatmul.bf16.gmra.mxu0 %v666
      %v726 = vpop.f32.mrf.mxu0
      %v727 = vadd.f32 0.0, %v726
      %v728 = vpop.f32.mrf.mxu0
      %v729 = vadd.f32 0.0, %v728
      %730 = vmatmul.bf16.gmra.mxu0 %v669
      %v731 = vpop.f32.mrf.mxu0
      %v732 = vadd.f32 0.0, %v731
      %v733 = vpop.f32.mrf.mxu0
      %v734 = vadd.f32 0.0, %v733
      %735 = vmatmul.bf16.gmra.mxu0 %v672
      %v736 = vpop.f32.mrf.mxu0
      %v737 = vadd.f32 0.0, %v736
      %v738 = vpop.f32.mrf.mxu0
      %v739 = vadd.f32 0.0, %v738
      %740 = vmatmul.bf16.gmra.mxu0 %v675
      %v741 = vpop.f32.mrf.mxu0
      %v742 = vadd.f32 0.0, %v741
      %v743 = vpop.f32.mrf.mxu0
      %v744 = vadd.f32 0.0, %v743
      %745 = vmatmul.bf16.gmra.mxu0 %v678
      %v746 = vpop.f32.mrf.mxu0
      %v747 = vadd.f32 0.0, %v746
      %v748 = vpop.f32.mrf.mxu0
      %v749 = vadd.f32 0.0, %v748
      %750 = vmatmul.bf16.gmra.mxu0 %v681
      %v751 = vpop.f32.mrf.mxu0
      %v752 = vadd.f32 0.0, %v751
      %v753 = vpop.f32.mrf.mxu0
      %v754 = vadd.f32 0.0, %v753
      %755 = vmatmul.bf16.gmra.mxu0 %v684
      %v756 = vpop.f32.mrf.mxu0
      %v757 = vadd.f32 0.0, %v756
      %v758 = vpop.f32.mrf.mxu0
      %v759 = vadd.f32 0.0, %v758
      %760 = vmatmul.bf16.gmra.mxu0 %v687
      %v761 = vpop.f32.mrf.mxu0
      %v762 = vadd.f32 0.0, %v761
      %v763 = vpop.f32.mrf.mxu0
      %v764 = vadd.f32 0.0, %v763
      %765 = vmatmul.bf16.gmra.mxu0 %v690
      %v766 = vpop.f32.mrf.mxu0
      %v767 = vadd.f32 0.0, %v766
      %v768 = vpop.f32.mrf.mxu0
      %v769 = vadd.f32 0.0, %v768
      %770 = vmatmul.bf16.gmra.mxu0 %v693
      %v771 = vpop.f32.mrf.mxu0
      %v772 = vadd.f32 0.0, %v771
      %v773 = vpop.f32.mrf.mxu0
      %v774 = vadd.f32 0.0, %v773
      %775 = vmatmul.bf16.gmra.mxu0 %v696
      %v776 = vpop.f32.mrf.mxu0
      %v777 = vadd.f32 0.0, %v776
      %v778 = vpop.f32.mrf.mxu0
      %v779 = vadd.f32 0.0, %v778
      %780 = vmatmul.bf16.gmra.mxu0 %v699
      %v781 = vpop.f32.mrf.mxu0
      %v782 = vadd.f32 0.0, %v781
      %v783 = vpop.f32.mrf.mxu0
      %v784 = vadd.f32 0.0, %v783
      %785 = vmatmul.bf16.gmra.mxu0 %v702
      %v786 = vpop.f32.mrf.mxu0
      %v787 = vadd.f32 0.0, %v786
      %v788 = vpop.f32.mrf.mxu0
      %v789 = vadd.f32 0.0, %v788
      %790 = vmatmul.bf16.gmra.mxu0 %v705
      %v791 = vpop.f32.mrf.mxu0
      %v792 = vadd.f32 0.0, %v791
      %v793 = vpop.f32.mrf.mxu0
      %v794 = vadd.f32 0.0, %v793
      %795 = vmatmul.bf16.gmra.mxu0 %v708
      %v796 = vpop.f32.mrf.mxu0
      %v797 = vadd.f32 0.0, %v796
      %v798 = vpop.f32.mrf.mxu0
      %v799 = vadd.f32 0.0, %v798
      %800 = vmatmul.bf16.gmra.mxu0 %v711
      %v801 = vpop.f32.mrf.mxu0
      %v802 = vadd.f32 0.0, %v801
      %v803 = vpop.f32.mrf.mxu0
      %v804 = vadd.f32 0.0, %v803
      %805 = vdwg.mxu0
      %v838 = vunpack.c.l.b16 %v172
      %v839 = vunpack.c.l.b16 %v173
      %v840 = vunpack.c.l.b16 %v175
      %v841 = vunpack.c.l.b16 %v176
      %v842 = vunpack.c.l.b16 %v178
      %v843 = vunpack.c.l.b16 %v179
      %v844 = vunpack.c.l.b16 %v181
      %v845 = vunpack.c.l.b16 %v182
      %v846 = vunpack.c.l.b16 %v184
      %v847 = vunpack.c.l.b16 %v185
      %v848 = vunpack.c.l.b16 %v187
      %v849 = vunpack.c.l.b16 %v188
      %v850 = vunpack.c.l.b16 %v190
      %v851 = vunpack.c.l.b16 %v191
      %v852 = vunpack.c.l.b16 %v193
      %v853 = vunpack.c.l.b16 %v194
      %v854 = vunpack.c.l.b16 %v196
      %v855 = vunpack.c.l.b16 %v197
      %v856 = vunpack.c.l.b16 %v199
      %v857 = vunpack.c.l.b16 %v200
      %v858 = vunpack.c.l.b16 %v202
      %v859 = vunpack.c.l.b16 %v203
      %v860 = vunpack.c.l.b16 %v205
      %v861 = vunpack.c.l.b16 %v206
      %v862 = vunpack.c.l.b16 %v208
      %v863 = vunpack.c.l.b16 %v209
      %v864 = vunpack.c.l.b16 %v211
      %v865 = vunpack.c.l.b16 %v212
      %v866 = vunpack.c.l.b16 %v214
      %v867 = vunpack.c.l.b16 %v215
      %v868 = vunpack.c.l.b16 %v217
      %v869 = vunpack.c.l.b16 %v218
      %v870 = vpack.c.b16 %v839, %v838
      %v871 = vpack.c.b16 %v841, %v840
      %v872 = vpack.c.b16 %v843, %v842
      %v873 = vpack.c.b16 %v845, %v844
      %v874 = vpack.c.b16 %v847, %v846
      %v875 = vpack.c.b16 %v849, %v848
      %v876 = vpack.c.b16 %v851, %v850
      %v877 = vpack.c.b16 %v853, %v852
      %v878 = vpack.c.b16 %v855, %v854
      %v879 = vpack.c.b16 %v857, %v856
      %v880 = vpack.c.b16 %v859, %v858
      %v881 = vpack.c.b16 %v861, %v860
      %v882 = vpack.c.b16 %v863, %v862
      %v883 = vpack.c.b16 %v865, %v864
      %v884 = vpack.c.b16 %v867, %v866
      %v885 = vpack.c.b16 %v869, %v868
      %v887 = vsel %vm664, %v870, 0
      %v890 = vsel %vm664, %v871, 0
      %v893 = vsel %vm664, %v872, 0
      %v896 = vsel %vm664, %v873, 0
      %v899 = vsel %vm664, %v874, 0
      %v902 = vsel %vm664, %v875, 0
      %v905 = vsel %vm664, %v876, 0
      %v908 = vsel %vm664, %v877, 0
      %v911 = vsel %vm664, %v878, 0
      %v914 = vsel %vm664, %v879, 0
      %v917 = vsel %vm664, %v880, 0
      %v920 = vsel %vm664, %v881, 0
      %v923 = vsel %vm664, %v882, 0
      %v926 = vsel %vm664, %v883, 0
      %v929 = vsel %vm664, %v884, 0
      %v932 = vsel %vm664, %v885, 0
      %v935 = vsel %vm713, %v226, 0
      %937 = vmatpush.bf16.msra.mxu0 0
      %938 = vmatpush.bf16.msra.mxu0 0
      %939 = vmatpush.bf16.msra.mxu0 0
      %940 = vmatpush.bf16.msra.mxu0 0
      %941 = vmatpush.bf16.msra.mxu0 0
      %942 = vmatpush.bf16.msra.mxu0 0
      %943 = vmatpush.bf16.msra.mxu0 0
      %944 = vmatpush.bf16.msra.mxu0 %v935
      %945 = vmatmul.bf16.gmra.mxu0 %v887
      %v946 = vpop.f32.mrf.mxu0
      %v947 = vadd.f32 %v727, %v946
      %v948 = vpop.f32.mrf.mxu0
      %v949 = vadd.f32 %v729, %v948
      %950 = vmatmul.bf16.gmra.mxu0 %v890
      %v951 = vpop.f32.mrf.mxu0
      %v952 = vadd.f32 %v732, %v951
      %v953 = vpop.f32.mrf.mxu0
      %v954 = vadd.f32 %v734, %v953
      %955 = vmatmul.bf16.gmra.mxu0 %v893
      %v956 = vpop.f32.mrf.mxu0
      %v957 = vadd.f32 %v737, %v956
      %v958 = vpop.f32.mrf.mxu0
      %v959 = vadd.f32 %v739, %v958
      %960 = vmatmul.bf16.gmra.mxu0 %v896
      %v961 = vpop.f32.mrf.mxu0
      %v962 = vadd.f32 %v742, %v961
      %v963 = vpop.f32.mrf.mxu0
      %v964 = vadd.f32 %v744, %v963
      %965 = vmatmul.bf16.gmra.mxu0 %v899
      %v966 = vpop.f32.mrf.mxu0
      %v967 = vadd.f32 %v747, %v966
      %v968 = vpop.f32.mrf.mxu0
      %v969 = vadd.f32 %v749, %v968
      %970 = vmatmul.bf16.gmra.mxu0 %v902
      %v971 = vpop.f32.mrf.mxu0
      %v972 = vadd.f32 %v752, %v971
      %v973 = vpop.f32.mrf.mxu0
      %v974 = vadd.f32 %v754, %v973
      %975 = vmatmul.bf16.gmra.mxu0 %v905
      %v976 = vpop.f32.mrf.mxu0
      %v977 = vadd.f32 %v757, %v976
      %v978 = vpop.f32.mrf.mxu0
      %v979 = vadd.f32 %v759, %v978
      %980 = vmatmul.bf16.gmra.mxu0 %v908
      %v981 = vpop.f32.mrf.mxu0
      %v982 = vadd.f32 %v762, %v981
      %v983 = vpop.f32.mrf.mxu0
      %v984 = vadd.f32 %v764, %v983
      %985 = vmatmul.bf16.gmra.mxu0 %v911
      %v986 = vpop.f32.mrf.mxu0
      %v987 = vadd.f32 %v767, %v986
      %v988 = vpop.f32.mrf.mxu0
      %v989 = vadd.f32 %v769, %v988
      %990 = vmatmul.bf16.gmra.mxu0 %v914
      %v991 = vpop.f32.mrf.mxu0
      %v992 = vadd.f32 %v772, %v991
      %v993 = vpop.f32.mrf.mxu0
      %v994 = vadd.f32 %v774, %v993
      %995 = vmatmul.bf16.gmra.mxu0 %v917
      %v996 = vpop.f32.mrf.mxu0
      %v997 = vadd.f32 %v777, %v996
      %v998 = vpop.f32.mrf.mxu0
      %v999 = vadd.f32 %v779, %v998
      %1000 = vmatmul.bf16.gmra.mxu0 %v920
      %v1001 = vpop.f32.mrf.mxu0
      %v1002 = vadd.f32 %v782, %v1001
      %v1003 = vpop.f32.mrf.mxu0
      %v1004 = vadd.f32 %v784, %v1003
      %1005 = vmatmul.bf16.gmra.mxu0 %v923
      %v1006 = vpop.f32.mrf.mxu0
      %v1007 = vadd.f32 %v787, %v1006
      %v1008 = vpop.f32.mrf.mxu0
      %v1009 = vadd.f32 %v789, %v1008
      %1010 = vmatmul.bf16.gmra.mxu0 %v926
      %v1011 = vpop.f32.mrf.mxu0
      %v1012 = vadd.f32 %v792, %v1011
      %v1013 = vpop.f32.mrf.mxu0
      %v1014 = vadd.f32 %v794, %v1013
      %1015 = vmatmul.bf16.gmra.mxu0 %v929
      %v1016 = vpop.f32.mrf.mxu0
      %v1017 = vadd.f32 %v797, %v1016
      %v1018 = vpop.f32.mrf.mxu0
      %v1019 = vadd.f32 %v799, %v1018
      %1020 = vmatmul.bf16.gmra.mxu0 %v932
      %v1021 = vpop.f32.mrf.mxu0
      %v1022 = vadd.f32 %v802, %v1021
      %v1023 = vpop.f32.mrf.mxu0
      %v1024 = vadd.f32 %v804, %v1023
      %1025 = vdwg.mxu0
      %vm1042 = vcmask 1042432
      %vm1043 = vcmask 1046532
      %vm1044 = vmor %vm1042, %vm1043
      %v1045 = vrot.slane %v172, 5
      %v1046 = vrot.slane %v1045, 4
      %v1047 = vrot.slane %v173, 5
      %v1048 = vsel %vm1044, %v1046, %v1047
      %v1049 = vrot.slane %v1047, 4
      %v1050 = vrot.slane %v174, 5
      %v1051 = vsel %vm1044, %v1049, %v1050
      %v1052 = vrot.slane %v175, 5
      %v1053 = vrot.slane %v1052, 4
      %v1054 = vrot.slane %v176, 5
      %v1055 = vsel %vm1044, %v1053, %v1054
      %v1056 = vrot.slane %v1054, 4
      %v1057 = vrot.slane %v177, 5
      %v1058 = vsel %vm1044, %v1056, %v1057
      %v1059 = vrot.slane %v178, 5
      %v1060 = vrot.slane %v1059, 4
      %v1061 = vrot.slane %v179, 5
      %v1062 = vsel %vm1044, %v1060, %v1061
      %v1063 = vrot.slane %v1061, 4
      %v1064 = vrot.slane %v180, 5
      %v1065 = vsel %vm1044, %v1063, %v1064
      %v1066 = vrot.slane %v181, 5
      %v1067 = vrot.slane %v1066, 4
      %v1068 = vrot.slane %v182, 5
      %v1069 = vsel %vm1044, %v1067, %v1068
      %v1070 = vrot.slane %v1068, 4
      %v1071 = vrot.slane %v183, 5
      %v1072 = vsel %vm1044, %v1070, %v1071
      %v1073 = vrot.slane %v184, 5
      %v1074 = vrot.slane %v1073, 4
      %v1075 = vrot.slane %v185, 5
      %v1076 = vsel %vm1044, %v1074, %v1075
      %v1077 = vrot.slane %v1075, 4
      %v1078 = vrot.slane %v186, 5
      %v1079 = vsel %vm1044, %v1077, %v1078
      %v1080 = vrot.slane %v187, 5
      %v1081 = vrot.slane %v1080, 4
      %v1082 = vrot.slane %v188, 5
      %v1083 = vsel %vm1044, %v1081, %v1082
      %v1084 = vrot.slane %v1082, 4
      %v1085 = vrot.slane %v189, 5
      %v1086 = vsel %vm1044, %v1084, %v1085
      %v1087 = vrot.slane %v190, 5
      %v1088 = vrot.slane %v1087, 4
      %v1089 = vrot.slane %v191, 5
      %v1090 = vsel %vm1044, %v1088, %v1089
      %v1091 = vrot.slane %v1089, 4
      %v1092 = vrot.slane %v192, 5
      %v1093 = vsel %vm1044, %v1091, %v1092
      %v1094 = vrot.slane %v193, 5
      %v1095 = vrot.slane %v1094, 4
      %v1096 = vrot.slane %v194, 5
      %v1097 = vsel %vm1044, %v1095, %v1096
      %v1098 = vrot.slane %v1096, 4
      %v1099 = vrot.slane %v195, 5
      %v1100 = vsel %vm1044, %v1098, %v1099
      %v1101 = vrot.slane %v196, 5
      %v1102 = vrot.slane %v1101, 4
      %v1103 = vrot.slane %v197, 5
      %v1104 = vsel %vm1044, %v1102, %v1103
      %v1105 = vrot.slane %v1103, 4
      %v1106 = vrot.slane %v198, 5
      %v1107 = vsel %vm1044, %v1105, %v1106
      %v1108 = vrot.slane %v199, 5
      %v1109 = vrot.slane %v1108, 4
      %v1110 = vrot.slane %v200, 5
      %v1111 = vsel %vm1044, %v1109, %v1110
      %v1112 = vrot.slane %v1110, 4
      %v1113 = vrot.slane %v201, 5
      %v1114 = vsel %vm1044, %v1112, %v1113
      %v1115 = vrot.slane %v202, 5
      %v1116 = vrot.slane %v1115, 4
      %v1117 = vrot.slane %v203, 5
      %v1118 = vsel %vm1044, %v1116, %v1117
      %v1119 = vrot.slane %v1117, 4
      %v1120 = vrot.slane %v204, 5
      %v1121 = vsel %vm1044, %v1119, %v1120
      %v1122 = vrot.slane %v205, 5
      %v1123 = vrot.slane %v1122, 4
      %v1124 = vrot.slane %v206, 5
      %v1125 = vsel %vm1044, %v1123, %v1124
      %v1126 = vrot.slane %v1124, 4
      %v1127 = vrot.slane %v207, 5
      %v1128 = vsel %vm1044, %v1126, %v1127
      %v1129 = vrot.slane %v208, 5
      %v1130 = vrot.slane %v1129, 4
      %v1131 = vrot.slane %v209, 5
      %v1132 = vsel %vm1044, %v1130, %v1131
      %v1133 = vrot.slane %v1131, 4
      %v1134 = vrot.slane %v210, 5
      %v1135 = vsel %vm1044, %v1133, %v1134
      %v1136 = vrot.slane %v211, 5
      %v1137 = vrot.slane %v1136, 4
      %v1138 = vrot.slane %v212, 5
      %v1139 = vsel %vm1044, %v1137, %v1138
      %v1140 = vrot.slane %v1138, 4
      %v1141 = vrot.slane %v213, 5
      %v1142 = vsel %vm1044, %v1140, %v1141
      %v1143 = vrot.slane %v214, 5
      %v1144 = vrot.slane %v1143, 4
      %v1145 = vrot.slane %v215, 5
      %v1146 = vsel %vm1044, %v1144, %v1145
      %v1147 = vrot.slane %v1145, 4
      %v1148 = vrot.slane %v216, 5
      %v1149 = vsel %vm1044, %v1147, %v1148
      %v1150 = vrot.slane %v217, 5
      %v1151 = vrot.slane %v1150, 4
      %v1152 = vrot.slane %v218, 5
      %v1153 = vsel %vm1044, %v1151, %v1152
      %v1154 = vrot.slane %v1152, 4
      %v1155 = vrot.slane %v219, 5
      %v1156 = vsel %vm1044, %v1154, %v1155
      %s1157 = scalar_lea.vmem %s1, 4
      %v1158 = vld [vmem:[%s1157] sm:$0x3]
      %v1159 = vunpack.c.l.b16 %v1048
      %v1160 = vunpack.c.l.b16 %v1051
      %v1161 = vunpack.c.l.b16 %v1055
      %v1162 = vunpack.c.l.b16 %v1058
      %v1163 = vunpack.c.l.b16 %v1062
      %v1164 = vunpack.c.l.b16 %v1065
      %v1165 = vunpack.c.l.b16 %v1069
      %v1166 = vunpack.c.l.b16 %v1072
      %v1167 = vunpack.c.l.b16 %v1076
      %v1168 = vunpack.c.l.b16 %v1079
      %v1169 = vunpack.c.l.b16 %v1083
      %v1170 = vunpack.c.l.b16 %v1086
      %v1171 = vunpack.c.l.b16 %v1090
      %v1172 = vunpack.c.l.b16 %v1093
      %v1173 = vunpack.c.l.b16 %v1097
      %v1174 = vunpack.c.l.b16 %v1100
      %v1175 = vunpack.c.l.b16 %v1104
      %v1176 = vunpack.c.l.b16 %v1107
      %v1177 = vunpack.c.l.b16 %v1111
      %v1178 = vunpack.c.l.b16 %v1114
      %v1179 = vunpack.c.l.b16 %v1118
      %v1180 = vunpack.c.l.b16 %v1121
      %v1181 = vunpack.c.l.b16 %v1125
      %v1182 = vunpack.c.l.b16 %v1128
      %v1183 = vunpack.c.l.b16 %v1132
      %v1184 = vunpack.c.l.b16 %v1135
      %v1185 = vunpack.c.l.b16 %v1139
      %v1186 = vunpack.c.l.b16 %v1142
      %v1187 = vunpack.c.l.b16 %v1146
      %v1188 = vunpack.c.l.b16 %v1149
      %v1189 = vunpack.c.l.b16 %v1153
      %v1190 = vunpack.c.l.b16 %v1156
      %v1191 = vpack.c.b16 %v1160, %v1159
      %v1192 = vpack.c.b16 %v1162, %v1161
      %v1193 = vpack.c.b16 %v1164, %v1163
      %v1194 = vpack.c.b16 %v1166, %v1165
      %v1195 = vpack.c.b16 %v1168, %v1167
      %v1196 = vpack.c.b16 %v1170, %v1169
      %v1197 = vpack.c.b16 %v1172, %v1171
      %v1198 = vpack.c.b16 %v1174, %v1173
      %v1199 = vpack.c.b16 %v1176, %v1175
      %v1200 = vpack.c.b16 %v1178, %v1177
      %v1201 = vpack.c.b16 %v1180, %v1179
      %v1202 = vpack.c.b16 %v1182, %v1181
      %v1203 = vpack.c.b16 %v1184, %v1183
      %v1204 = vpack.c.b16 %v1186, %v1185
      %v1205 = vpack.c.b16 %v1188, %v1187
      %v1206 = vpack.c.b16 %v1190, %v1189
      %v1208 = vsel %vm664, %v1191, 0
      %v1211 = vsel %vm664, %v1192, 0
      %v1214 = vsel %vm664, %v1193, 0
      %v1217 = vsel %vm664, %v1194, 0
      %v1220 = vsel %vm664, %v1195, 0
      %v1223 = vsel %vm664, %v1196, 0
      %v1226 = vsel %vm664, %v1197, 0
      %v1229 = vsel %vm664, %v1198, 0
      %v1232 = vsel %vm664, %v1199, 0
      %v1235 = vsel %vm664, %v1200, 0
      %v1238 = vsel %vm664, %v1201, 0
      %v1241 = vsel %vm664, %v1202, 0
      %v1244 = vsel %vm664, %v1203, 0
      %v1247 = vsel %vm664, %v1204, 0
      %v1250 = vsel %vm664, %v1205, 0
      %v1253 = vsel %vm664, %v1206, 0
      %v1256 = vsel %vm713, %v1158, 0
      %1258 = vmatpush.bf16.msra.mxu0 0
      %1259 = vmatpush.bf16.msra.mxu0 0
      %1260 = vmatpush.bf16.msra.mxu0 0
      %1261 = vmatpush.bf16.msra.mxu0 0
      %1262 = vmatpush.bf16.msra.mxu0 0
      %1263 = vmatpush.bf16.msra.mxu0 0
      %1264 = vmatpush.bf16.msra.mxu0 0
      %1265 = vmatpush.bf16.msra.mxu0 %v1256
      %1266 = vmatmul.bf16.gmra.mxu0 %v1208
      %v1267 = vpop.f32.mrf.mxu0
      %v1268 = vadd.f32 0.0, %v1267
      %v1269 = vpop.f32.mrf.mxu0
      %v1270 = vadd.f32 0.0, %v1269
      %1271 = vmatmul.bf16.gmra.mxu0 %v1211
      %v1272 = vpop.f32.mrf.mxu0
      %v1273 = vadd.f32 0.0, %v1272
      %v1274 = vpop.f32.mrf.mxu0
      %v1275 = vadd.f32 0.0, %v1274
      %1276 = vmatmul.bf16.gmra.mxu0 %v1214
      %v1277 = vpop.f32.mrf.mxu0
      %v1278 = vadd.f32 0.0, %v1277
      %v1279 = vpop.f32.mrf.mxu0
      %v1280 = vadd.f32 0.0, %v1279
      %1281 = vmatmul.bf16.gmra.mxu0 %v1217
      %v1282 = vpop.f32.mrf.mxu0
      %v1283 = vadd.f32 0.0, %v1282
      %v1284 = vpop.f32.mrf.mxu0
      %v1285 = vadd.f32 0.0, %v1284
      %1286 = vmatmul.bf16.gmra.mxu0 %v1220
      %v1287 = vpop.f32.mrf.mxu0
      %v1288 = vadd.f32 0.0, %v1287
      %v1289 = vpop.f32.mrf.mxu0
      %v1290 = vadd.f32 0.0, %v1289
      %1291 = vmatmul.bf16.gmra.mxu0 %v1223
      %v1292 = vpop.f32.mrf.mxu0
      %v1293 = vadd.f32 0.0, %v1292
      %v1294 = vpop.f32.mrf.mxu0
      %v1295 = vadd.f32 0.0, %v1294
      %1296 = vmatmul.bf16.gmra.mxu0 %v1226
      %v1297 = vpop.f32.mrf.mxu0
      %v1298 = vadd.f32 0.0, %v1297
      %v1299 = vpop.f32.mrf.mxu0
      %v1300 = vadd.f32 0.0, %v1299
      %1301 = vmatmul.bf16.gmra.mxu0 %v1229
      %v1302 = vpop.f32.mrf.mxu0
      %v1303 = vadd.f32 0.0, %v1302
      %v1304 = vpop.f32.mrf.mxu0
      %v1305 = vadd.f32 0.0, %v1304
      %1306 = vmatmul.bf16.gmra.mxu0 %v1232
      %v1307 = vpop.f32.mrf.mxu0
      %v1308 = vadd.f32 0.0, %v1307
      %v1309 = vpop.f32.mrf.mxu0
      %v1310 = vadd.f32 0.0, %v1309
      %1311 = vmatmul.bf16.gmra.mxu0 %v1235
      %v1312 = vpop.f32.mrf.mxu0
      %v1313 = vadd.f32 0.0, %v1312
      %v1314 = vpop.f32.mrf.mxu0
      %v1315 = vadd.f32 0.0, %v1314
      %1316 = vmatmul.bf16.gmra.mxu0 %v1238
      %v1317 = vpop.f32.mrf.mxu0
      %v1318 = vadd.f32 0.0, %v1317
      %v1319 = vpop.f32.mrf.mxu0
      %v1320 = vadd.f32 0.0, %v1319
      %1321 = vmatmul.bf16.gmra.mxu0 %v1241
      %v1322 = vpop.f32.mrf.mxu0
      %v1323 = vadd.f32 0.0, %v1322
      %v1324 = vpop.f32.mrf.mxu0
      %v1325 = vadd.f32 0.0, %v1324
      %1326 = vmatmul.bf16.gmra.mxu0 %v1244
      %v1327 = vpop.f32.mrf.mxu0
      %v1328 = vadd.f32 0.0, %v1327
      %v1329 = vpop.f32.mrf.mxu0
      %v1330 = vadd.f32 0.0, %v1329
      %1331 = vmatmul.bf16.gmra.mxu0 %v1247
      %v1332 = vpop.f32.mrf.mxu0
      %v1333 = vadd.f32 0.0, %v1332
      %v1334 = vpop.f32.mrf.mxu0
      %v1335 = vadd.f32 0.0, %v1334
      %1336 = vmatmul.bf16.gmra.mxu0 %v1250
      %v1337 = vpop.f32.mrf.mxu0
      %v1338 = vadd.f32 0.0, %v1337
      %v1339 = vpop.f32.mrf.mxu0
      %v1340 = vadd.f32 0.0, %v1339
      %1341 = vmatmul.bf16.gmra.mxu0 %v1253
      %v1342 = vpop.f32.mrf.mxu0
      %v1343 = vadd.f32 0.0, %v1342
      %v1344 = vpop.f32.mrf.mxu0
      %v1345 = vadd.f32 0.0, %v1344
      %1346 = vdwg.mxu0
      %v1347 = vadd.f32 %v947, %v1268
      %v1348 = vadd.f32 %v949, %v1270
      %v1349 = vadd.f32 %v952, %v1273
      %v1350 = vadd.f32 %v954, %v1275
      %v1351 = vadd.f32 %v957, %v1278
      %v1352 = vadd.f32 %v959, %v1280
      %v1353 = vadd.f32 %v962, %v1283
      %v1354 = vadd.f32 %v964, %v1285
      %v1355 = vadd.f32 %v967, %v1288
      %v1356 = vadd.f32 %v969, %v1290
      %v1357 = vadd.f32 %v972, %v1293
      %v1358 = vadd.f32 %v974, %v1295
      %v1359 = vadd.f32 %v977, %v1298
      %v1360 = vadd.f32 %v979, %v1300
      %v1361 = vadd.f32 %v982, %v1303
      %v1362 = vadd.f32 %v984, %v1305
      %v1363 = vadd.f32 %v987, %v1308
      %v1364 = vadd.f32 %v989, %v1310
      %v1365 = vadd.f32 %v992, %v1313
      %v1366 = vadd.f32 %v994, %v1315
      %v1367 = vadd.f32 %v997, %v1318
      %v1368 = vadd.f32 %v999, %v1320
      %v1369 = vadd.f32 %v1002, %v1323
      %v1370 = vadd.f32 %v1004, %v1325
      %v1371 = vadd.f32 %v1007, %v1328
      %v1372 = vadd.f32 %v1009, %v1330
      %v1373 = vadd.f32 %v1012, %v1333
      %v1374 = vadd.f32 %v1014, %v1335
      %v1375 = vadd.f32 %v1017, %v1338
      %v1376 = vadd.f32 %v1019, %v1340
      %v1377 = vadd.f32 %v1022, %v1343
      %v1378 = vadd.f32 %v1024, %v1345
      %s1379 = scalar_lea.vmem %s1, 6
      %v1380 = vld [vmem:[%s1379] sm:$0x3]
      %v1383 = vunpack.c.l.b16 %v220
      %v1384 = vunpack.c.l.b16 %v221
      %v1385 = vpack.c.b16 %v1384, %v1383
      %v1387 = vsel %vm664, %v1385, 0
      %v1390 = vsel %vm713, %v1380, 0
      %1392 = vmatpush.bf16.msra.mxu0 0
      %1393 = vmatpush.bf16.msra.mxu0 0
      %1394 = vmatpush.bf16.msra.mxu0 0
      %1395 = vmatpush.bf16.msra.mxu0 0
      %1396 = vmatpush.bf16.msra.mxu0 0
      %1397 = vmatpush.bf16.msra.mxu0 0
      %1398 = vmatpush.bf16.msra.mxu0 0
      %1399 = vmatpush.bf16.msra.mxu0 %v1390
      %1400 = vmatmul.bf16.gmra.mxu0 %v890
      %v1401 = vpop.f32.mrf.mxu0
      %v1402 = vadd.f32 0.0, %v1401
      %v1403 = vpop.f32.mrf.mxu0
      %v1404 = vadd.f32 0.0, %v1403
      %1405 = vmatmul.bf16.gmra.mxu0 %v893
      %v1406 = vpop.f32.mrf.mxu0
      %v1407 = vadd.f32 0.0, %v1406
      %v1408 = vpop.f32.mrf.mxu0
      %v1409 = vadd.f32 0.0, %v1408
      %1410 = vmatmul.bf16.gmra.mxu0 %v896
      %v1411 = vpop.f32.mrf.mxu0
      %v1412 = vadd.f32 0.0, %v1411
      %v1413 = vpop.f32.mrf.mxu0
      %v1414 = vadd.f32 0.0, %v1413
      %1415 = vmatmul.bf16.gmra.mxu0 %v899
      %v1416 = vpop.f32.mrf.mxu0
      %v1417 = vadd.f32 0.0, %v1416
      %v1418 = vpop.f32.mrf.mxu0
      %v1419 = vadd.f32 0.0, %v1418
      %1420 = vmatmul.bf16.gmra.mxu0 %v902
      %v1421 = vpop.f32.mrf.mxu0
      %v1422 = vadd.f32 0.0, %v1421
      %v1423 = vpop.f32.mrf.mxu0
      %v1424 = vadd.f32 0.0, %v1423
      %1425 = vmatmul.bf16.gmra.mxu0 %v905
      %v1426 = vpop.f32.mrf.mxu0
      %v1427 = vadd.f32 0.0, %v1426
      %v1428 = vpop.f32.mrf.mxu0
      %v1429 = vadd.f32 0.0, %v1428
      %1430 = vmatmul.bf16.gmra.mxu0 %v908
      %v1431 = vpop.f32.mrf.mxu0
      %v1432 = vadd.f32 0.0, %v1431
      %v1433 = vpop.f32.mrf.mxu0
      %v1434 = vadd.f32 0.0, %v1433
      %1435 = vmatmul.bf16.gmra.mxu0 %v911
      %v1436 = vpop.f32.mrf.mxu0
      %v1437 = vadd.f32 0.0, %v1436
      %v1438 = vpop.f32.mrf.mxu0
      %v1439 = vadd.f32 0.0, %v1438
      %1440 = vmatmul.bf16.gmra.mxu0 %v914
      %v1441 = vpop.f32.mrf.mxu0
      %v1442 = vadd.f32 0.0, %v1441
      %v1443 = vpop.f32.mrf.mxu0
      %v1444 = vadd.f32 0.0, %v1443
      %1445 = vmatmul.bf16.gmra.mxu0 %v917
      %v1446 = vpop.f32.mrf.mxu0
      %v1447 = vadd.f32 0.0, %v1446
      %v1448 = vpop.f32.mrf.mxu0
      %v1449 = vadd.f32 0.0, %v1448
      %1450 = vmatmul.bf16.gmra.mxu0 %v920
      %v1451 = vpop.f32.mrf.mxu0
      %v1452 = vadd.f32 0.0, %v1451
      %v1453 = vpop.f32.mrf.mxu0
      %v1454 = vadd.f32 0.0, %v1453
      %1455 = vmatmul.bf16.gmra.mxu0 %v923
      %v1456 = vpop.f32.mrf.mxu0
      %v1457 = vadd.f32 0.0, %v1456
      %v1458 = vpop.f32.mrf.mxu0
      %v1459 = vadd.f32 0.0, %v1458
      %1460 = vmatmul.bf16.gmra.mxu0 %v926
      %v1461 = vpop.f32.mrf.mxu0
      %v1462 = vadd.f32 0.0, %v1461
      %v1463 = vpop.f32.mrf.mxu0
      %v1464 = vadd.f32 0.0, %v1463
      %1465 = vmatmul.bf16.gmra.mxu0 %v929
      %v1466 = vpop.f32.mrf.mxu0
      %v1467 = vadd.f32 0.0, %v1466
      %v1468 = vpop.f32.mrf.mxu0
      %v1469 = vadd.f32 0.0, %v1468
      %1470 = vmatmul.bf16.gmra.mxu0 %v932
      %v1471 = vpop.f32.mrf.mxu0
      %v1472 = vadd.f32 0.0, %v1471
      %v1473 = vpop.f32.mrf.mxu0
      %v1474 = vadd.f32 0.0, %v1473
      %1475 = vmatmul.bf16.gmra.mxu0 %v1387
      %v1476 = vpop.f32.mrf.mxu0
      %v1477 = vadd.f32 0.0, %v1476
      %v1478 = vpop.f32.mrf.mxu0
      %v1479 = vadd.f32 0.0, %v1478
      %1480 = vdwg.mxu0
      %v1481 = vadd.f32 %v1347, %v1402
      %v1482 = vadd.f32 %v1348, %v1404
      %v1483 = vadd.f32 %v1349, %v1407
      %v1484 = vadd.f32 %v1350, %v1409
      %v1485 = vadd.f32 %v1351, %v1412
      %v1486 = vadd.f32 %v1352, %v1414
      %v1487 = vadd.f32 %v1353, %v1417
      %v1488 = vadd.f32 %v1354, %v1419
      %v1489 = vadd.f32 %v1355, %v1422
      %v1490 = vadd.f32 %v1356, %v1424
      %v1491 = vadd.f32 %v1357, %v1427
      %v1492 = vadd.f32 %v1358, %v1429
      %v1493 = vadd.f32 %v1359, %v1432
      %v1494 = vadd.f32 %v1360, %v1434
      %v1495 = vadd.f32 %v1361, %v1437
      %v1496 = vadd.f32 %v1362, %v1439
      %v1497 = vadd.f32 %v1363, %v1442
      %v1498 = vadd.f32 %v1364, %v1444
      %v1499 = vadd.f32 %v1365, %v1447
      %v1500 = vadd.f32 %v1366, %v1449
      %v1501 = vadd.f32 %v1367, %v1452
      %v1502 = vadd.f32 %v1368, %v1454
      %v1503 = vadd.f32 %v1369, %v1457
      %v1504 = vadd.f32 %v1370, %v1459
      %v1505 = vadd.f32 %v1371, %v1462
      %v1506 = vadd.f32 %v1372, %v1464
      %v1507 = vadd.f32 %v1373, %v1467
      %v1508 = vadd.f32 %v1374, %v1469
      %v1509 = vadd.f32 %v1375, %v1472
      %v1510 = vadd.f32 %v1376, %v1474
      %v1511 = vadd.f32 %v1377, %v1477
      %v1512 = vadd.f32 %v1378, %v1479
      %v1514 = vshrl.u32 %v220, 16
      %v1516 = vrot.slane %v1514, 4
      %v1517 = vshll.u32 %v220, 16
      %v1519 = vrot.slane %v1517, 5
      %v1520 = vor.u32 %v1516, %v1519
      %v1521 = vrot.slane %v1520, 4
      %v1523 = vshll.u32 %v221, 16
      %v1525 = vrot.slane %v1523, 5
      %v1526 = vsel %vm229, %v1521, %v1525
      %v1527 = vshrl.u32 %v221, 16
      %v1529 = vrot.slane %v1527, 4
      %v1530 = vor.u32 %v1529, %v1525
      %v1531 = vrot.slane %v1530, 4
      %v1533 = vshll.u32 %v222, 16
      %v1535 = vrot.slane %v1533, 5
      %v1536 = vsel %vm229, %v1531, %v1535
      %s1537 = scalar_lea.vmem %s1, 8
      %v1538 = vld [vmem:[%s1537] sm:$0x3]
      %v1539 = vunpack.c.l.b16 %v1526
      %v1540 = vunpack.c.l.b16 %v1536
      %v1541 = vpack.c.b16 %v1540, %v1539
      %v1543 = vsel %vm664, %v1541, 0
      %v1546 = vsel %vm713, %v1538, 0
      %1548 = vmatpush.bf16.msra.mxu0 0
      %1549 = vmatpush.bf16.msra.mxu0 0
      %1550 = vmatpush.bf16.msra.mxu0 0
      %1551 = vmatpush.bf16.msra.mxu0 0
      %1552 = vmatpush.bf16.msra.mxu0 0
      %1553 = vmatpush.bf16.msra.mxu0 0
      %1554 = vmatpush.bf16.msra.mxu0 0
      %1555 = vmatpush.bf16.msra.mxu0 %v1546
      %1556 = vmatmul.bf16.gmra.mxu0 %v669
      %v1557 = vpop.f32.mrf.mxu0
      %v1558 = vadd.f32 0.0, %v1557
      %v1559 = vpop.f32.mrf.mxu0
      %v1560 = vadd.f32 0.0, %v1559
      %1561 = vmatmul.bf16.gmra.mxu0 %v672
      %v1562 = vpop.f32.mrf.mxu0
      %v1563 = vadd.f32 0.0, %v1562
      %v1564 = vpop.f32.mrf.mxu0
      %v1565 = vadd.f32 0.0, %v1564
      %1566 = vmatmul.bf16.gmra.mxu0 %v675
      %v1567 = vpop.f32.mrf.mxu0
      %v1568 = vadd.f32 0.0, %v1567
      %v1569 = vpop.f32.mrf.mxu0
      %v1570 = vadd.f32 0.0, %v1569
      %1571 = vmatmul.bf16.gmra.mxu0 %v678
      %v1572 = vpop.f32.mrf.mxu0
      %v1573 = vadd.f32 0.0, %v1572
      %v1574 = vpop.f32.mrf.mxu0
      %v1575 = vadd.f32 0.0, %v1574
      %1576 = vmatmul.bf16.gmra.mxu0 %v681
      %v1577 = vpop.f32.mrf.mxu0
      %v1578 = vadd.f32 0.0, %v1577
      %v1579 = vpop.f32.mrf.mxu0
      %v1580 = vadd.f32 0.0, %v1579
      %1581 = vmatmul.bf16.gmra.mxu0 %v684
      %v1582 = vpop.f32.mrf.mxu0
      %v1583 = vadd.f32 0.0, %v1582
      %v1584 = vpop.f32.mrf.mxu0
      %v1585 = vadd.f32 0.0, %v1584
      %1586 = vmatmul.bf16.gmra.mxu0 %v687
      %v1587 = vpop.f32.mrf.mxu0
      %v1588 = vadd.f32 0.0, %v1587
      %v1589 = vpop.f32.mrf.mxu0
      %v1590 = vadd.f32 0.0, %v1589
      %1591 = vmatmul.bf16.gmra.mxu0 %v690
      %v1592 = vpop.f32.mrf.mxu0
      %v1593 = vadd.f32 0.0, %v1592
      %v1594 = vpop.f32.mrf.mxu0
      %v1595 = vadd.f32 0.0, %v1594
      %1596 = vmatmul.bf16.gmra.mxu0 %v693
      %v1597 = vpop.f32.mrf.mxu0
      %v1598 = vadd.f32 0.0, %v1597
      %v1599 = vpop.f32.mrf.mxu0
      %v1600 = vadd.f32 0.0, %v1599
      %1601 = vmatmul.bf16.gmra.mxu0 %v696
      %v1602 = vpop.f32.mrf.mxu0
      %v1603 = vadd.f32 0.0, %v1602
      %v1604 = vpop.f32.mrf.mxu0
      %v1605 = vadd.f32 0.0, %v1604
      %1606 = vmatmul.bf16.gmra.mxu0 %v699
      %v1607 = vpop.f32.mrf.mxu0
      %v1608 = vadd.f32 0.0, %v1607
      %v1609 = vpop.f32.mrf.mxu0
      %v1610 = vadd.f32 0.0, %v1609
      %1611 = vmatmul.bf16.gmra.mxu0 %v702
      %v1612 = vpop.f32.mrf.mxu0
      %v1613 = vadd.f32 0.0, %v1612
      %v1614 = vpop.f32.mrf.mxu0
      %v1615 = vadd.f32 0.0, %v1614
      %1616 = vmatmul.bf16.gmra.mxu0 %v705
      %v1617 = vpop.f32.mrf.mxu0
      %v1618 = vadd.f32 0.0, %v1617
      %v1619 = vpop.f32.mrf.mxu0
      %v1620 = vadd.f32 0.0, %v1619
      %1621 = vmatmul.bf16.gmra.mxu0 %v708
      %v1622 = vpop.f32.mrf.mxu0
      %v1623 = vadd.f32 0.0, %v1622
      %v1624 = vpop.f32.mrf.mxu0
      %v1625 = vadd.f32 0.0, %v1624
      %1626 = vmatmul.bf16.gmra.mxu0 %v711
      %v1627 = vpop.f32.mrf.mxu0
      %v1628 = vadd.f32 0.0, %v1627
      %v1629 = vpop.f32.mrf.mxu0
      %v1630 = vadd.f32 0.0, %v1629
      %1631 = vmatmul.bf16.gmra.mxu0 %v1543
      %v1632 = vpop.f32.mrf.mxu0
      %v1633 = vadd.f32 0.0, %v1632
      %v1634 = vpop.f32.mrf.mxu0
      %v1635 = vadd.f32 0.0, %v1634
      %1636 = vdwg.mxu0
      %v1637 = vadd.f32 %v1481, %v1558
      %v1638 = vadd.f32 %v1482, %v1560
      %v1639 = vadd.f32 %v1483, %v1563
      %v1640 = vadd.f32 %v1484, %v1565
      %v1641 = vadd.f32 %v1485, %v1568
      %v1642 = vadd.f32 %v1486, %v1570
      %v1643 = vadd.f32 %v1487, %v1573
      %v1644 = vadd.f32 %v1488, %v1575
      %v1645 = vadd.f32 %v1489, %v1578
      %v1646 = vadd.f32 %v1490, %v1580
      %v1647 = vadd.f32 %v1491, %v1583
      %v1648 = vadd.f32 %v1492, %v1585
      %v1649 = vadd.f32 %v1493, %v1588
      %v1650 = vadd.f32 %v1494, %v1590
      %v1651 = vadd.f32 %v1495, %v1593
      %v1652 = vadd.f32 %v1496, %v1595
      %v1653 = vadd.f32 %v1497, %v1598
      %v1654 = vadd.f32 %v1498, %v1600
      %v1655 = vadd.f32 %v1499, %v1603
      %v1656 = vadd.f32 %v1500, %v1605
      %v1657 = vadd.f32 %v1501, %v1608
      %v1658 = vadd.f32 %v1502, %v1610
      %v1659 = vadd.f32 %v1503, %v1613
      %v1660 = vadd.f32 %v1504, %v1615
      %v1661 = vadd.f32 %v1505, %v1618
      %v1662 = vadd.f32 %v1506, %v1620
      %v1663 = vadd.f32 %v1507, %v1623
      %v1664 = vadd.f32 %v1508, %v1625
      %v1665 = vadd.f32 %v1509, %v1628
      %v1666 = vadd.f32 %v1510, %v1630
      %v1667 = vadd.f32 %v1511, %v1633
      %v1668 = vadd.f32 %v1512, %v1635
      %v1670 = vrot.slane %v220, 5
      %v1671 = vrot.slane %v1670, 4
      %v1672 = vrot.slane %v221, 5
      %v1673 = vsel %vm1044, %v1671, %v1672
      %v1674 = vrot.slane %v1672, 4
      %v1675 = vrot.slane %v222, 5
      %v1676 = vsel %vm1044, %v1674, %v1675
      %s1677 = scalar_lea.vmem %s1, 10
      %v1678 = vld [vmem:[%s1677] sm:$0x3]
      %v1679 = vunpack.c.l.b16 %v1673
      %v1680 = vunpack.c.l.b16 %v1676
      %v1681 = vpack.c.b16 %v1680, %v1679
      %v1683 = vsel %vm664, %v1681, 0
      %v1686 = vsel %vm713, %v1678, 0
      %1688 = vmatpush.bf16.msra.mxu0 0
      %1689 = vmatpush.bf16.msra.mxu0 0
      %1690 = vmatpush.bf16.msra.mxu0 0
      %1691 = vmatpush.bf16.msra.mxu0 0
      %1692 = vmatpush.bf16.msra.mxu0 0
      %1693 = vmatpush.bf16.msra.mxu0 0
      %1694 = vmatpush.bf16.msra.mxu0 0
      %1695 = vmatpush.bf16.msra.mxu0 %v1686
      %1696 = vmatmul.bf16.gmra.mxu0 %v1211
      %v1697 = vpop.f32.mrf.mxu0
      %v1698 = vadd.f32 0.0, %v1697
      %v1699 = vpop.f32.mrf.mxu0
      %v1700 = vadd.f32 0.0, %v1699
      %1701 = vmatmul.bf16.gmra.mxu0 %v1214
      %v1702 = vpop.f32.mrf.mxu0
      %v1703 = vadd.f32 0.0, %v1702
      %v1704 = vpop.f32.mrf.mxu0
      %v1705 = vadd.f32 0.0, %v1704
      %1706 = vmatmul.bf16.gmra.mxu0 %v1217
      %v1707 = vpop.f32.mrf.mxu0
      %v1708 = vadd.f32 0.0, %v1707
      %v1709 = vpop.f32.mrf.mxu0
      %v1710 = vadd.f32 0.0, %v1709
      %1711 = vmatmul.bf16.gmra.mxu0 %v1220
      %v1712 = vpop.f32.mrf.mxu0
      %v1713 = vadd.f32 0.0, %v1712
      %v1714 = vpop.f32.mrf.mxu0
      %v1715 = vadd.f32 0.0, %v1714
      %1716 = vmatmul.bf16.gmra.mxu0 %v1223
      %v1717 = vpop.f32.mrf.mxu0
      %v1718 = vadd.f32 0.0, %v1717
      %v1719 = vpop.f32.mrf.mxu0
      %v1720 = vadd.f32 0.0, %v1719
      %1721 = vmatmul.bf16.gmra.mxu0 %v1226
      %v1722 = vpop.f32.mrf.mxu0
      %v1723 = vadd.f32 0.0, %v1722
      %v1724 = vpop.f32.mrf.mxu0
      %v1725 = vadd.f32 0.0, %v1724
      %1726 = vmatmul.bf16.gmra.mxu0 %v1229
      %v1727 = vpop.f32.mrf.mxu0
      %v1728 = vadd.f32 0.0, %v1727
      %v1729 = vpop.f32.mrf.mxu0
      %v1730 = vadd.f32 0.0, %v1729
      %1731 = vmatmul.bf16.gmra.mxu0 %v1232
      %v1732 = vpop.f32.mrf.mxu0
      %v1733 = vadd.f32 0.0, %v1732
      %v1734 = vpop.f32.mrf.mxu0
      %v1735 = vadd.f32 0.0, %v1734
      %1736 = vmatmul.bf16.gmra.mxu0 %v1235
      %v1737 = vpop.f32.mrf.mxu0
      %v1738 = vadd.f32 0.0, %v1737
      %v1739 = vpop.f32.mrf.mxu0
      %v1740 = vadd.f32 0.0, %v1739
      %1741 = vmatmul.bf16.gmra.mxu0 %v1238
      %v1742 = vpop.f32.mrf.mxu0
      %v1743 = vadd.f32 0.0, %v1742
      %v1744 = vpop.f32.mrf.mxu0
      %v1745 = vadd.f32 0.0, %v1744
      %1746 = vmatmul.bf16.gmra.mxu0 %v1241
      %v1747 = vpop.f32.mrf.mxu0
      %v1748 = vadd.f32 0.0, %v1747
      %v1749 = vpop.f32.mrf.mxu0
      %v1750 = vadd.f32 0.0, %v1749
      %1751 = vmatmul.bf16.gmra.mxu0 %v1244
      %v1752 = vpop.f32.mrf.mxu0
      %v1753 = vadd.f32 0.0, %v1752
      %v1754 = vpop.f32.mrf.mxu0
      %v1755 = vadd.f32 0.0, %v1754
      %1756 = vmatmul.bf16.gmra.mxu0 %v1247
      %v1757 = vpop.f32.mrf.mxu0
      %v1758 = vadd.f32 0.0, %v1757
      %v1759 = vpop.f32.mrf.mxu0
      %v1760 = vadd.f32 0.0, %v1759
      %1761 = vmatmul.bf16.gmra.mxu0 %v1250
      %v1762 = vpop.f32.mrf.mxu0
      %v1763 = vadd.f32 0.0, %v1762
      %v1764 = vpop.f32.mrf.mxu0
      %v1765 = vadd.f32 0.0, %v1764
      %1766 = vmatmul.bf16.gmra.mxu0 %v1253
      %v1767 = vpop.f32.mrf.mxu0
      %v1768 = vadd.f32 0.0, %v1767
      %v1769 = vpop.f32.mrf.mxu0
      %v1770 = vadd.f32 0.0, %v1769
      %1771 = vmatmul.bf16.gmra.mxu0 %v1683
      %v1772 = vpop.f32.mrf.mxu0
      %v1773 = vadd.f32 0.0, %v1772
      %v1774 = vpop.f32.mrf.mxu0
      %v1775 = vadd.f32 0.0, %v1774
      %1776 = vdwg.mxu0
      %v1777 = vadd.f32 %v1637, %v1698
      %v1778 = vadd.f32 %v1638, %v1700
      %v1779 = vadd.f32 %v1639, %v1703
      %v1780 = vadd.f32 %v1640, %v1705
      %v1781 = vadd.f32 %v1641, %v1708
      %v1782 = vadd.f32 %v1642, %v1710
      %v1783 = vadd.f32 %v1643, %v1713
      %v1784 = vadd.f32 %v1644, %v1715
      %v1785 = vadd.f32 %v1645, %v1718
      %v1786 = vadd.f32 %v1646, %v1720
      %v1787 = vadd.f32 %v1647, %v1723
      %v1788 = vadd.f32 %v1648, %v1725
      %v1789 = vadd.f32 %v1649, %v1728
      %v1790 = vadd.f32 %v1650, %v1730
      %v1791 = vadd.f32 %v1651, %v1733
      %v1792 = vadd.f32 %v1652, %v1735
      %v1793 = vadd.f32 %v1653, %v1738
      %v1794 = vadd.f32 %v1654, %v1740
      %v1795 = vadd.f32 %v1655, %v1743
      %v1796 = vadd.f32 %v1656, %v1745
      %v1797 = vadd.f32 %v1657, %v1748
      %v1798 = vadd.f32 %v1658, %v1750
      %v1799 = vadd.f32 %v1659, %v1753
      %v1800 = vadd.f32 %v1660, %v1755
      %v1801 = vadd.f32 %v1661, %v1758
      %v1802 = vadd.f32 %v1662, %v1760
      %v1803 = vadd.f32 %v1663, %v1763
      %v1804 = vadd.f32 %v1664, %v1765
      %v1805 = vadd.f32 %v1665, %v1768
      %v1806 = vadd.f32 %v1666, %v1770
      %v1807 = vadd.f32 %v1667, %v1773
      %v1808 = vadd.f32 %v1668, %v1775
      %s1809 = scalar_lea.vmem %s1, 12
      %v1810 = vld [vmem:[%s1809] sm:$0x3]
      %v1813 = vunpack.c.l.b16 %v223
      %v1814 = vunpack.c.l.b16 %v224
      %v1815 = vpack.c.b16 %v1814, %v1813
      %v1817 = vsel %vm664, %v1815, 0
      %v1820 = vsel %vm713, %v1810, 0
      %1822 = vmatpush.bf16.msra.mxu0 0
      %1823 = vmatpush.bf16.msra.mxu0 0
      %1824 = vmatpush.bf16.msra.mxu0 0
      %1825 = vmatpush.bf16.msra.mxu0 0
      %1826 = vmatpush.bf16.msra.mxu0 0
      %1827 = vmatpush.bf16.msra.mxu0 0
      %1828 = vmatpush.bf16.msra.mxu0 0
      %1829 = vmatpush.bf16.msra.mxu0 %v1820
      %1830 = vmatmul.bf16.gmra.mxu0 %v893
      %v1831 = vpop.f32.mrf.mxu0
      %v1832 = vadd.f32 0.0, %v1831
      %v1833 = vpop.f32.mrf.mxu0
      %v1834 = vadd.f32 0.0, %v1833
      %1835 = vmatmul.bf16.gmra.mxu0 %v896
      %v1836 = vpop.f32.mrf.mxu0
      %v1837 = vadd.f32 0.0, %v1836
      %v1838 = vpop.f32.mrf.mxu0
      %v1839 = vadd.f32 0.0, %v1838
      %1840 = vmatmul.bf16.gmra.mxu0 %v899
      %v1841 = vpop.f32.mrf.mxu0
      %v1842 = vadd.f32 0.0, %v1841
      %v1843 = vpop.f32.mrf.mxu0
      %v1844 = vadd.f32 0.0, %v1843
      %1845 = vmatmul.bf16.gmra.mxu0 %v902
      %v1846 = vpop.f32.mrf.mxu0
      %v1847 = vadd.f32 0.0, %v1846
      %v1848 = vpop.f32.mrf.mxu0
      %v1849 = vadd.f32 0.0, %v1848
      %1850 = vmatmul.bf16.gmra.mxu0 %v905
      %v1851 = vpop.f32.mrf.mxu0
      %v1852 = vadd.f32 0.0, %v1851
      %v1853 = vpop.f32.mrf.mxu0
      %v1854 = vadd.f32 0.0, %v1853
      %1855 = vmatmul.bf16.gmra.mxu0 %v908
      %v1856 = vpop.f32.mrf.mxu0
      %v1857 = vadd.f32 0.0, %v1856
      %v1858 = vpop.f32.mrf.mxu0
      %v1859 = vadd.f32 0.0, %v1858
      %1860 = vmatmul.bf16.gmra.mxu0 %v911
      %v1861 = vpop.f32.mrf.mxu0
      %v1862 = vadd.f32 0.0, %v1861
      %v1863 = vpop.f32.mrf.mxu0
      %v1864 = vadd.f32 0.0, %v1863
      %1865 = vmatmul.bf16.gmra.mxu0 %v914
      %v1866 = vpop.f32.mrf.mxu0
      %v1867 = vadd.f32 0.0, %v1866
      %v1868 = vpop.f32.mrf.mxu0
      %v1869 = vadd.f32 0.0, %v1868
      %1870 = vmatmul.bf16.gmra.mxu0 %v917
      %v1871 = vpop.f32.mrf.mxu0
      %v1872 = vadd.f32 0.0, %v1871
      %v1873 = vpop.f32.mrf.mxu0
      %v1874 = vadd.f32 0.0, %v1873
      %1875 = vmatmul.bf16.gmra.mxu0 %v920
      %v1876 = vpop.f32.mrf.mxu0
      %v1877 = vadd.f32 0.0, %v1876
      %v1878 = vpop.f32.mrf.mxu0
      %v1879 = vadd.f32 0.0, %v1878
      %1880 = vmatmul.bf16.gmra.mxu0 %v923
      %v1881 = vpop.f32.mrf.mxu0
      %v1882 = vadd.f32 0.0, %v1881
      %v1883 = vpop.f32.mrf.mxu0
      %v1884 = vadd.f32 0.0, %v1883
      %1885 = vmatmul.bf16.gmra.mxu0 %v926
      %v1886 = vpop.f32.mrf.mxu0
      %v1887 = vadd.f32 0.0, %v1886
      %v1888 = vpop.f32.mrf.mxu0
      %v1889 = vadd.f32 0.0, %v1888
      %1890 = vmatmul.bf16.gmra.mxu0 %v929
      %v1891 = vpop.f32.mrf.mxu0
      %v1892 = vadd.f32 0.0, %v1891
      %v1893 = vpop.f32.mrf.mxu0
      %v1894 = vadd.f32 0.0, %v1893
      %1895 = vmatmul.bf16.gmra.mxu0 %v932
      %v1896 = vpop.f32.mrf.mxu0
      %v1897 = vadd.f32 0.0, %v1896
      %v1898 = vpop.f32.mrf.mxu0
      %v1899 = vadd.f32 0.0, %v1898
      %1900 = vmatmul.bf16.gmra.mxu0 %v1387
      %v1901 = vpop.f32.mrf.mxu0
      %v1902 = vadd.f32 0.0, %v1901
      %v1903 = vpop.f32.mrf.mxu0
      %v1904 = vadd.f32 0.0, %v1903
      %1905 = vmatmul.bf16.gmra.mxu0 %v1817
      %v1906 = vpop.f32.mrf.mxu0
      %v1907 = vadd.f32 0.0, %v1906
      %v1908 = vpop.f32.mrf.mxu0
      %v1909 = vadd.f32 0.0, %v1908
      %1910 = vdwg.mxu0
      %v1911 = vadd.f32 %v1777, %v1832
      %v1912 = vadd.f32 %v1778, %v1834
      %v1913 = vadd.f32 %v1779, %v1837
      %v1914 = vadd.f32 %v1780, %v1839
      %v1915 = vadd.f32 %v1781, %v1842
      %v1916 = vadd.f32 %v1782, %v1844
      %v1917 = vadd.f32 %v1783, %v1847
      %v1918 = vadd.f32 %v1784, %v1849
      %v1919 = vadd.f32 %v1785, %v1852
      %v1920 = vadd.f32 %v1786, %v1854
      %v1921 = vadd.f32 %v1787, %v1857
      %v1922 = vadd.f32 %v1788, %v1859
      %v1923 = vadd.f32 %v1789, %v1862
      %v1924 = vadd.f32 %v1790, %v1864
      %v1925 = vadd.f32 %v1791, %v1867
      %v1926 = vadd.f32 %v1792, %v1869
      %v1927 = vadd.f32 %v1793, %v1872
      %v1928 = vadd.f32 %v1794, %v1874
      %v1929 = vadd.f32 %v1795, %v1877
      %v1930 = vadd.f32 %v1796, %v1879
      %v1931 = vadd.f32 %v1797, %v1882
      %v1932 = vadd.f32 %v1798, %v1884
      %v1933 = vadd.f32 %v1799, %v1887
      %v1934 = vadd.f32 %v1800, %v1889
      %v1935 = vadd.f32 %v1801, %v1892
      %v1936 = vadd.f32 %v1802, %v1894
      %v1937 = vadd.f32 %v1803, %v1897
      %v1938 = vadd.f32 %v1804, %v1899
      %v1939 = vadd.f32 %v1805, %v1902
      %v1940 = vadd.f32 %v1806, %v1904
      %v1941 = vadd.f32 %v1807, %v1907
      %v1942 = vadd.f32 %v1808, %v1909
      %v1944 = vshrl.u32 %v223, 16
      %v1946 = vrot.slane %v1944, 4
      %v1947 = vshll.u32 %v223, 16
      %v1949 = vrot.slane %v1947, 5
      %v1950 = vor.u32 %v1946, %v1949
      %v1951 = vrot.slane %v1950, 4
      %v1953 = vshll.u32 %v224, 16
      %v1955 = vrot.slane %v1953, 5
      %v1956 = vsel %vm229, %v1951, %v1955
      %v1957 = vshrl.u32 %v224, 16
      %v1959 = vrot.slane %v1957, 4
      %v1960 = vor.u32 %v1959, %v1955
      %v1961 = vrot.slane %v1960, 4
      %v1963 = vshll.u32 %v225, 16
      %v1965 = vrot.slane %v1963, 5
      %v1966 = vsel %vm229, %v1961, %v1965
      %s1967 = scalar_lea.vmem %s1, 14
      %v1968 = vld [vmem:[%s1967] sm:$0x3]
      %v1969 = vunpack.c.l.b16 %v1956
      %v1970 = vunpack.c.l.b16 %v1966
      %v1971 = vpack.c.b16 %v1970, %v1969
      %v1973 = vsel %vm664, %v1971, 0
      %v1976 = vsel %vm713, %v1968, 0
      %1978 = vmatpush.bf16.msra.mxu0 0
      %1979 = vmatpush.bf16.msra.mxu0 0
      %1980 = vmatpush.bf16.msra.mxu0 0
      %1981 = vmatpush.bf16.msra.mxu0 0
      %1982 = vmatpush.bf16.msra.mxu0 0
      %1983 = vmatpush.bf16.msra.mxu0 0
      %1984 = vmatpush.bf16.msra.mxu0 0
      %1985 = vmatpush.bf16.msra.mxu0 %v1976
      %1986 = vmatmul.bf16.gmra.mxu0 %v672
      %v1987 = vpop.f32.mrf.mxu0
      %v1988 = vadd.f32 0.0, %v1987
      %v1989 = vpop.f32.mrf.mxu0
      %v1990 = vadd.f32 0.0, %v1989
      %1991 = vmatmul.bf16.gmra.mxu0 %v675
      %v1992 = vpop.f32.mrf.mxu0
      %v1993 = vadd.f32 0.0, %v1992
      %v1994 = vpop.f32.mrf.mxu0
      %v1995 = vadd.f32 0.0, %v1994
      %1996 = vmatmul.bf16.gmra.mxu0 %v678
      %v1997 = vpop.f32.mrf.mxu0
      %v1998 = vadd.f32 0.0, %v1997
      %v1999 = vpop.f32.mrf.mxu0
      %v2000 = vadd.f32 0.0, %v1999
      %2001 = vmatmul.bf16.gmra.mxu0 %v681
      %v2002 = vpop.f32.mrf.mxu0
      %v2003 = vadd.f32 0.0, %v2002
      %v2004 = vpop.f32.mrf.mxu0
      %v2005 = vadd.f32 0.0, %v2004
      %2006 = vmatmul.bf16.gmra.mxu0 %v684
      %v2007 = vpop.f32.mrf.mxu0
      %v2008 = vadd.f32 0.0, %v2007
      %v2009 = vpop.f32.mrf.mxu0
      %v2010 = vadd.f32 0.0, %v2009
      %2011 = vmatmul.bf16.gmra.mxu0 %v687
      %v2012 = vpop.f32.mrf.mxu0
      %v2013 = vadd.f32 0.0, %v2012
      %v2014 = vpop.f32.mrf.mxu0
      %v2015 = vadd.f32 0.0, %v2014
      %2016 = vmatmul.bf16.gmra.mxu0 %v690
      %v2017 = vpop.f32.mrf.mxu0
      %v2018 = vadd.f32 0.0, %v2017
      %v2019 = vpop.f32.mrf.mxu0
      %v2020 = vadd.f32 0.0, %v2019
      %2021 = vmatmul.bf16.gmra.mxu0 %v693
      %v2022 = vpop.f32.mrf.mxu0
      %v2023 = vadd.f32 0.0, %v2022
      %v2024 = vpop.f32.mrf.mxu0
      %v2025 = vadd.f32 0.0, %v2024
      %2026 = vmatmul.bf16.gmra.mxu0 %v696
      %v2027 = vpop.f32.mrf.mxu0
      %v2028 = vadd.f32 0.0, %v2027
      %v2029 = vpop.f32.mrf.mxu0
      %v2030 = vadd.f32 0.0, %v2029
      %2031 = vmatmul.bf16.gmra.mxu0 %v699
      %v2032 = vpop.f32.mrf.mxu0
      %v2033 = vadd.f32 0.0, %v2032
      %v2034 = vpop.f32.mrf.mxu0
      %v2035 = vadd.f32 0.0, %v2034
      %2036 = vmatmul.bf16.gmra.mxu0 %v702
      %v2037 = vpop.f32.mrf.mxu0
      %v2038 = vadd.f32 0.0, %v2037
      %v2039 = vpop.f32.mrf.mxu0
      %v2040 = vadd.f32 0.0, %v2039
      %2041 = vmatmul.bf16.gmra.mxu0 %v705
      %v2042 = vpop.f32.mrf.mxu0
      %v2043 = vadd.f32 0.0, %v2042
      %v2044 = vpop.f32.mrf.mxu0
      %v2045 = vadd.f32 0.0, %v2044
      %2046 = vmatmul.bf16.gmra.mxu0 %v708
      %v2047 = vpop.f32.mrf.mxu0
      %v2048 = vadd.f32 0.0, %v2047
      %v2049 = vpop.f32.mrf.mxu0
      %v2050 = vadd.f32 0.0, %v2049
      %2051 = vmatmul.bf16.gmra.mxu0 %v711
      %v2052 = vpop.f32.mrf.mxu0
      %v2053 = vadd.f32 0.0, %v2052
      %v2054 = vpop.f32.mrf.mxu0
      %v2055 = vadd.f32 0.0, %v2054
      %2056 = vmatmul.bf16.gmra.mxu0 %v1543
      %v2057 = vpop.f32.mrf.mxu0
      %v2058 = vadd.f32 0.0, %v2057
      %v2059 = vpop.f32.mrf.mxu0
      %v2060 = vadd.f32 0.0, %v2059
      %2061 = vmatmul.bf16.gmra.mxu0 %v1973
      %v2062 = vpop.f32.mrf.mxu0
      %v2063 = vadd.f32 0.0, %v2062
      %v2064 = vpop.f32.mrf.mxu0
      %v2065 = vadd.f32 0.0, %v2064
      %2066 = vdwg.mxu0
      %v2067 = vadd.f32 %v1911, %v1988
      %v2068 = vadd.f32 %v1912, %v1990
      %v2069 = vadd.f32 %v1913, %v1993
      %v2070 = vadd.f32 %v1914, %v1995
      %v2071 = vadd.f32 %v1915, %v1998
      %v2072 = vadd.f32 %v1916, %v2000
      %v2073 = vadd.f32 %v1917, %v2003
      %v2074 = vadd.f32 %v1918, %v2005
      %v2075 = vadd.f32 %v1919, %v2008
      %v2076 = vadd.f32 %v1920, %v2010
      %v2077 = vadd.f32 %v1921, %v2013
      %v2078 = vadd.f32 %v1922, %v2015
      %v2079 = vadd.f32 %v1923, %v2018
      %v2080 = vadd.f32 %v1924, %v2020
      %v2081 = vadd.f32 %v1925, %v2023
      %v2082 = vadd.f32 %v1926, %v2025
      %v2083 = vadd.f32 %v1927, %v2028
      %v2084 = vadd.f32 %v1928, %v2030
      %v2085 = vadd.f32 %v1929, %v2033
      %v2086 = vadd.f32 %v1930, %v2035
      %v2087 = vadd.f32 %v1931, %v2038
      %v2088 = vadd.f32 %v1932, %v2040
      %v2089 = vadd.f32 %v1933, %v2043
      %v2090 = vadd.f32 %v1934, %v2045
      %v2091 = vadd.f32 %v1935, %v2048
      %v2092 = vadd.f32 %v1936, %v2050
      %v2093 = vadd.f32 %v1937, %v2053
      %v2094 = vadd.f32 %v1938, %v2055
      %v2095 = vadd.f32 %v1939, %v2058
      %v2096 = vadd.f32 %v1940, %v2060
      %v2097 = vadd.f32 %v1941, %v2063
      %v2098 = vadd.f32 %v1942, %v2065
      %v2100 = vrot.slane %v223, 5
      %v2101 = vrot.slane %v2100, 4
      %v2102 = vrot.slane %v224, 5
      %v2103 = vsel %vm1044, %v2101, %v2102
      %v2104 = vrot.slane %v2102, 4
      %v2105 = vrot.slane %v225, 5
      %v2106 = vsel %vm1044, %v2104, %v2105
      %s2107 = scalar_lea.vmem %s1, 16
      %v2108 = vld [vmem:[%s2107] sm:$0x3]
      %v2109 = vunpack.c.l.b16 %v2103
      %v2110 = vunpack.c.l.b16 %v2106
      %v2111 = vpack.c.b16 %v2110, %v2109
      %v2113 = vsel %vm664, %v2111, 0
      %v2116 = vsel %vm713, %v2108, 0
      %2118 = vmatpush.bf16.msra.mxu0 0
      %2119 = vmatpush.bf16.msra.mxu0 0
      %2120 = vmatpush.bf16.msra.mxu0 0
      %2121 = vmatpush.bf16.msra.mxu0 0
      %2122 = vmatpush.bf16.msra.mxu0 0
      %2123 = vmatpush.bf16.msra.mxu0 0
      %2124 = vmatpush.bf16.msra.mxu0 0
      %2125 = vmatpush.bf16.msra.mxu0 %v2116
      %2126 = vmatmul.bf16.gmra.mxu0 %v1214
      %v2127 = vpop.f32.mrf.mxu0
      %v2128 = vadd.f32 0.0, %v2127
      %v2129 = vpop.f32.mrf.mxu0
      %v2130 = vadd.f32 0.0, %v2129
      %2131 = vmatmul.bf16.gmra.mxu0 %v1217
      %v2132 = vpop.f32.mrf.mxu0
      %v2133 = vadd.f32 0.0, %v2132
      %v2134 = vpop.f32.mrf.mxu0
      %v2135 = vadd.f32 0.0, %v2134
      %2136 = vmatmul.bf16.gmra.mxu0 %v1220
      %v2137 = vpop.f32.mrf.mxu0
      %v2138 = vadd.f32 0.0, %v2137
      %v2139 = vpop.f32.mrf.mxu0
      %v2140 = vadd.f32 0.0, %v2139
      %2141 = vmatmul.bf16.gmra.mxu0 %v1223
      %v2142 = vpop.f32.mrf.mxu0
      %v2143 = vadd.f32 0.0, %v2142
      %v2144 = vpop.f32.mrf.mxu0
      %v2145 = vadd.f32 0.0, %v2144
      %2146 = vmatmul.bf16.gmra.mxu0 %v1226
      %v2147 = vpop.f32.mrf.mxu0
      %v2148 = vadd.f32 0.0, %v2147
      %v2149 = vpop.f32.mrf.mxu0
      %v2150 = vadd.f32 0.0, %v2149
      %2151 = vmatmul.bf16.gmra.mxu0 %v1229
      %v2152 = vpop.f32.mrf.mxu0
      %v2153 = vadd.f32 0.0, %v2152
      %v2154 = vpop.f32.mrf.mxu0
      %v2155 = vadd.f32 0.0, %v2154
      %2156 = vmatmul.bf16.gmra.mxu0 %v1232
      %v2157 = vpop.f32.mrf.mxu0
      %v2158 = vadd.f32 0.0, %v2157
      %v2159 = vpop.f32.mrf.mxu0
      %v2160 = vadd.f32 0.0, %v2159
      %2161 = vmatmul.bf16.gmra.mxu0 %v1235
      %v2162 = vpop.f32.mrf.mxu0
      %v2163 = vadd.f32 0.0, %v2162
      %v2164 = vpop.f32.mrf.mxu0
      %v2165 = vadd.f32 0.0, %v2164
      %2166 = vmatmul.bf16.gmra.mxu0 %v1238
      %v2167 = vpop.f32.mrf.mxu0
      %v2168 = vadd.f32 0.0, %v2167
      %v2169 = vpop.f32.mrf.mxu0
      %v2170 = vadd.f32 0.0, %v2169
      %2171 = vmatmul.bf16.gmra.mxu0 %v1241
      %v2172 = vpop.f32.mrf.mxu0
      %v2173 = vadd.f32 0.0, %v2172
      %v2174 = vpop.f32.mrf.mxu0
      %v2175 = vadd.f32 0.0, %v2174
      %2176 = vmatmul.bf16.gmra.mxu0 %v1244
      %v2177 = vpop.f32.mrf.mxu0
      %v2178 = vadd.f32 0.0, %v2177
      %v2179 = vpop.f32.mrf.mxu0
      %v2180 = vadd.f32 0.0, %v2179
      %2181 = vmatmul.bf16.gmra.mxu0 %v1247
      %v2182 = vpop.f32.mrf.mxu0
      %v2183 = vadd.f32 0.0, %v2182
      %v2184 = vpop.f32.mrf.mxu0
      %v2185 = vadd.f32 0.0, %v2184
      %2186 = vmatmul.bf16.gmra.mxu0 %v1250
      %v2187 = vpop.f32.mrf.mxu0
      %v2188 = vadd.f32 0.0, %v2187
      %v2189 = vpop.f32.mrf.mxu0
      %v2190 = vadd.f32 0.0, %v2189
      %2191 = vmatmul.bf16.gmra.mxu0 %v1253
      %v2192 = vpop.f32.mrf.mxu0
      %v2193 = vadd.f32 0.0, %v2192
      %v2194 = vpop.f32.mrf.mxu0
      %v2195 = vadd.f32 0.0, %v2194
      %2196 = vmatmul.bf16.gmra.mxu0 %v1683
      %v2197 = vpop.f32.mrf.mxu0
      %v2198 = vadd.f32 0.0, %v2197
      %v2199 = vpop.f32.mrf.mxu0
      %v2200 = vadd.f32 0.0, %v2199
      %2201 = vmatmul.bf16.gmra.mxu0 %v2113
      %v2202 = vpop.f32.mrf.mxu0
      %v2203 = vadd.f32 0.0, %v2202
      %v2204 = vpop.f32.mrf.mxu0
      %v2205 = vadd.f32 0.0, %v2204
      %2206 = vdwg.mxu0
      %v2207 = vadd.f32 %v2067, %v2128
      %v2208 = vadd.f32 %v2068, %v2130
      %v2209 = vadd.f32 %v2069, %v2133
      %v2210 = vadd.f32 %v2070, %v2135
      %v2211 = vadd.f32 %v2071, %v2138
      %v2212 = vadd.f32 %v2072, %v2140
      %v2213 = vadd.f32 %v2073, %v2143
      %v2214 = vadd.f32 %v2074, %v2145
      %v2215 = vadd.f32 %v2075, %v2148
      %v2216 = vadd.f32 %v2076, %v2150
      %v2217 = vadd.f32 %v2077, %v2153
      %v2218 = vadd.f32 %v2078, %v2155
      %v2219 = vadd.f32 %v2079, %v2158
      %v2220 = vadd.f32 %v2080, %v2160
      %v2221 = vadd.f32 %v2081, %v2163
      %v2222 = vadd.f32 %v2082, %v2165
      %v2223 = vadd.f32 %v2083, %v2168
      %v2224 = vadd.f32 %v2084, %v2170
      %v2225 = vadd.f32 %v2085, %v2173
      %v2226 = vadd.f32 %v2086, %v2175
      %v2227 = vadd.f32 %v2087, %v2178
      %v2228 = vadd.f32 %v2088, %v2180
      %v2229 = vadd.f32 %v2089, %v2183
      %v2230 = vadd.f32 %v2090, %v2185
      %v2231 = vadd.f32 %v2091, %v2188
      %v2232 = vadd.f32 %v2092, %v2190
      %v2233 = vadd.f32 %v2093, %v2193
      %v2234 = vadd.f32 %v2094, %v2195
      %v2235 = vadd.f32 %v2095, %v2198
      %v2236 = vadd.f32 %v2096, %v2200
      %v2237 = vadd.f32 %v2097, %v2203
      %v2238 = vadd.f32 %v2098, %v2205
      %v2239 = vld [vmem:[%s2] sm:$0x1]
      %v2241 = vperm.slane %v2239, 0
      %v2243 = vadd.f32 %v2207, %v2241
      %v2244 = vadd.f32 %v2208, %v2241
      %v2245 = vadd.f32 %v2209, %v2241
      %v2246 = vadd.f32 %v2210, %v2241
      %v2247 = vadd.f32 %v2211, %v2241
      %v2248 = vadd.f32 %v2212, %v2241
      %v2249 = vadd.f32 %v2213, %v2241
      %v2250 = vadd.f32 %v2214, %v2241
      %v2251 = vadd.f32 %v2215, %v2241
      %v2252 = vadd.f32 %v2216, %v2241
      %v2253 = vadd.f32 %v2217, %v2241
      %v2254 = vadd.f32 %v2218, %v2241
      %v2255 = vadd.f32 %v2219, %v2241
      %v2256 = vadd.f32 %v2220, %v2241
      %v2257 = vadd.f32 %v2221, %v2241
      %v2258 = vadd.f32 %v2222, %v2241
      %v2259 = vadd.f32 %v2223, %v2241
      %v2260 = vadd.f32 %v2224, %v2241
      %v2261 = vadd.f32 %v2225, %v2241
      %v2262 = vadd.f32 %v2226, %v2241
      %v2263 = vadd.f32 %v2227, %v2241
      %v2264 = vadd.f32 %v2228, %v2241
      %v2265 = vadd.f32 %v2229, %v2241
      %v2266 = vadd.f32 %v2230, %v2241
      %v2267 = vadd.f32 %v2231, %v2241
      %v2268 = vadd.f32 %v2232, %v2241
      %v2269 = vadd.f32 %v2233, %v2241
      %v2270 = vadd.f32 %v2234, %v2241
      %v2271 = vadd.f32 %v2235, %v2241
      %v2272 = vadd.f32 %v2236, %v2241
      %v2273 = vadd.f32 %v2237, %v2241
      %v2274 = vadd.f32 %v2238, %v2241
      %v2275 = vmax.f32 %v2243, 0.0
      %v2276 = vmax.f32 %v2244, 0.0
      %v2277 = vmax.f32 %v2245, 0.0
      %v2278 = vmax.f32 %v2246, 0.0
      %v2279 = vmax.f32 %v2247, 0.0
      %v2280 = vmax.f32 %v2248, 0.0
      %v2281 = vmax.f32 %v2249, 0.0
      %v2282 = vmax.f32 %v2250, 0.0
      %v2283 = vmax.f32 %v2251, 0.0
      %v2284 = vmax.f32 %v2252, 0.0
      %v2285 = vmax.f32 %v2253, 0.0
      %v2286 = vmax.f32 %v2254, 0.0
      %v2287 = vmax.f32 %v2255, 0.0
      %v2288 = vmax.f32 %v2256, 0.0
      %v2289 = vmax.f32 %v2257, 0.0
      %v2290 = vmax.f32 %v2258, 0.0
      %v2291 = vmax.f32 %v2259, 0.0
      %v2292 = vmax.f32 %v2260, 0.0
      %v2293 = vmax.f32 %v2261, 0.0
      %v2294 = vmax.f32 %v2262, 0.0
      %v2295 = vmax.f32 %v2263, 0.0
      %v2296 = vmax.f32 %v2264, 0.0
      %v2297 = vmax.f32 %v2265, 0.0
      %v2298 = vmax.f32 %v2266, 0.0
      %v2299 = vmax.f32 %v2267, 0.0
      %v2300 = vmax.f32 %v2268, 0.0
      %v2301 = vmax.f32 %v2269, 0.0
      %v2302 = vmax.f32 %v2270, 0.0
      %v2303 = vmax.f32 %v2271, 0.0
      %v2304 = vmax.f32 %v2272, 0.0
      %v2305 = vmax.f32 %v2273, 0.0
      %v2306 = vmax.f32 %v2274, 0.0
      %v2307 = vmin.f32 %v2275, 6.0
      %v2308 = vmin.f32 %v2276, 6.0
      %v2309 = vmin.f32 %v2277, 6.0
      %v2310 = vmin.f32 %v2278, 6.0
      %v2311 = vmin.f32 %v2279, 6.0
      %v2312 = vmin.f32 %v2280, 6.0
      %v2313 = vmin.f32 %v2281, 6.0
      %v2314 = vmin.f32 %v2282, 6.0
      %v2315 = vmin.f32 %v2283, 6.0
      %v2316 = vmin.f32 %v2284, 6.0
      %v2317 = vmin.f32 %v2285, 6.0
      %v2318 = vmin.f32 %v2286, 6.0
      %v2319 = vmin.f32 %v2287, 6.0
      %v2320 = vmin.f32 %v2288, 6.0
      %v2321 = vmin.f32 %v2289, 6.0
      %v2322 = vmin.f32 %v2290, 6.0
      %v2323 = vmin.f32 %v2291, 6.0
      %v2324 = vmin.f32 %v2292, 6.0
      %v2325 = vmin.f32 %v2293, 6.0
      %v2326 = vmin.f32 %v2294, 6.0
      %v2327 = vmin.f32 %v2295, 6.0
      %v2328 = vmin.f32 %v2296, 6.0
      %v2329 = vmin.f32 %v2297, 6.0
      %v2330 = vmin.f32 %v2298, 6.0
      %v2331 = vmin.f32 %v2299, 6.0
      %v2332 = vmin.f32 %v2300, 6.0
      %v2333 = vmin.f32 %v2301, 6.0
      %v2334 = vmin.f32 %v2302, 6.0
      %v2335 = vmin.f32 %v2303, 6.0
      %v2336 = vmin.f32 %v2304, 6.0
      %v2337 = vmin.f32 %v2305, 6.0
      %v2338 = vmin.f32 %v2306, 6.0
      %2339 = vst [vmem:[%s170] sm:$0xff] %v2307
      %2340 = vst [vmem:[%s170 + $0x8] sm:$0xff] %v2308
      %2341 = vst [vmem:[%s170 + $0x10] sm:$0xff] %v2309
      %2342 = vst [vmem:[%s170 + $0x18] sm:$0xff] %v2310
      %2343 = vst [vmem:[%s170 + $0x20] sm:$0xff] %v2311
      %2344 = vst [vmem:[%s170 + $0x28] sm:$0xff] %v2312
      %2345 = vst [vmem:[%s170 + $0x30] sm:$0xff] %v2313
      %2346 = vst [vmem:[%s170 + $0x38] sm:$0xff] %v2314
      %2347 = vst [vmem:[%s170 + $0x40] sm:$0xff] %v2315
      %2348 = vst [vmem:[%s170 + $0x48] sm:$0xff] %v2316
      %2349 = vst [vmem:[%s170 + $0x50] sm:$0xff] %v2317
      %2350 = vst [vmem:[%s170 + $0x58] sm:$0xff] %v2318
      %2351 = vst [vmem:[%s170 + $0x60] sm:$0xff] %v2319
      %2352 = vst [vmem:[%s170 + $0x68] sm:$0xff] %v2320
      %2353 = vst [vmem:[%s170 + $0x70] sm:$0xff] %v2321
      %2354 = vst [vmem:[%s170 + $0x78] sm:$0xff] %v2322
      %2355 = vst [vmem:[%s170 + $0x80] sm:$0xff] %v2323
      %2356 = vst [vmem:[%s170 + $0x88] sm:$0xff] %v2324
      %2357 = vst [vmem:[%s170 + $0x90] sm:$0xff] %v2325
      %2358 = vst [vmem:[%s170 + $0x98] sm:$0xff] %v2326
      %2359 = vst [vmem:[%s170 + $0xa0] sm:$0xff] %v2327
      %2360 = vst [vmem:[%s170 + $0xa8] sm:$0xff] %v2328
      %2361 = vst [vmem:[%s170 + $0xb0] sm:$0xff] %v2329
      %2362 = vst [vmem:[%s170 + $0xb8] sm:$0xff] %v2330
      %2363 = vst [vmem:[%s170 + $0xc0] sm:$0xff] %v2331
      %2364 = vst [vmem:[%s170 + $0xc8] sm:$0xff] %v2332
      %2365 = vst [vmem:[%s170 + $0xd0] sm:$0xff] %v2333
      %2366 = vst [vmem:[%s170 + $0xd8] sm:$0xff] %v2334
      %2367 = vst [vmem:[%s170 + $0xe0] sm:$0xff] %v2335
      %2368 = vst [vmem:[%s170 + $0xe8] sm:$0xff] %v2336
      %2369 = vst [vmem:[%s170 + $0xf0] sm:$0xff] %v2337
      %2370 = vst [vmem:[%s170 + $0xf8] sm:$0xff] %v2338
      %p2371 = scmp.lt.s32.totalorder %s14, 1
      %s2372 = scalar_select %p2371, %s14, 1
      %s2373 = smul.addr %s2372, 32
      %s2374 = smul.addr %s2373, 8
      %s2375 = scalar_lea.vmem %s3, %s2374
      // Predicated region
      $region33: #{conv_layer_forward.1} parent=31 // pred_check
        %p2376 = pneg %p100
      $region34: #{conv_layer_forward.1} parent=31 // pred_check_branch
        %2378 = sbr.rel (%p2376) target = $region36
      $region35: #{conv_layer_forward.1} parent=31 // pred_region
        _
      $region36: #{conv_layer_forward.1} parent=31 // pred_fallthru
        _
    $region32: #{conv_layer_forward.1} parent=5 // pred_fallthru
      _
    %p2379 = scmp.le.s32.totalorder 2, %s9
    // Predicated region
    $region37: #{conv_layer_forward.1} parent=5 // pred_check
      %p2380 = pneg %p2379
    $region38: #{conv_layer_forward.1} parent=5 // pred_check_branch
      %2382 = sbr.rel (%p2380) target = $region40
    $region39: #{conv_layer_forward.1} parent=5 // pred_region
      %s2383 = ssub.s32 %s9, 2
      // Predicated region
      $region41: #{conv_layer_forward.1} parent=39 // pred_check
        %p2384 = pneg %p106
      $region42: #{conv_layer_forward.1} parent=39 // pred_check_branch
        %2386 = sbr.rel (%p2384) target = $region44
      $region43: #{conv_layer_forward.1} parent=39 // pred_region
        %p2387 = scmp.lt.s32.totalorder %s15, 1
        %s2388 = scalar_select %p2387, %s15, 1
        %s2389 = smul.addr %s2388, 32
        %s2390 = smul.addr %s2389, 8
        %s2391 = scalar_lea.vmem %s3, %s2390
      $region44: #{conv_layer_forward.1} parent=39 // pred_fallthru
        _
    $region40: #{conv_layer_forward.1} parent=5 // pred_fallthru
      _
  $region6: #{conv_layer_forward.1} parent=0 // loop_footer
    %s13 = sadd.s32 1, %s9
  $region7: #{conv_layer_forward.1} parent=0 // loop_footer_branch
    %8 = sbr.rel target = $region3
  $region8: #{conv_layer_forward.1} parent=0 // loop_exit
    _

</llo_original>
